<compile_context>
chip_gen: v6e
topology: v6e:2x2x1
jax: 0.10.0
libtpu: 0.0.40
codegen_flags: <defaults>
</compile_context>

<pallas_src>
import jax
import jax.numpy as jnp
from jax.experimental import pallas as pl
from jax.experimental.pallas import tpu as pltpu

C = 2048        # backbone feature channels (ResNet-50 stage 4)
K = 16          # conv16 output channels
H = W = 7       # featmap spatial size (AvgPool2d(7, stride=1) -> 1x1)
HW = H * W      # 49 real spatial positions
HWP = 56        # spatial padded to a sublane multiple (7 * 8); pad rows are zero
BN_EPS = 1e-5


def _sam_head_kernel(fmap_ref, w_ref, shift_ref, featcov_ref, fm_ref):
    """fmap_ref: (Bb, HWP, C) bf16 channels-minor (pad rows zero),
    w_ref: (C, K) bf16 (BN scale pre-folded), shift_ref: (1, K) f32.
    Outputs: featcov (Bb, HWP, K) f32, fm (Bb, K, C) f32 (already divided by 49)."""
    bb, hwp, c = fmap_ref.shape
    k = w_ref.shape[1]

    # --- 1x1 conv over the merged batch: (Bb*HWP, C) @ (C, K) -> (Bb*HWP, K) ---
    # Tile-aligned reshape (HWP is a multiple of 8): no relayout, MXU-native form.
    fmap2d = fmap_ref[...].reshape(bb * hwp, c)
    conv = jax.lax.dot_general(
        fmap2d, w_ref[...],
        dimension_numbers=(((1,), (0,)), ((), ())),
        preferred_element_type=jnp.float32)                      # (Bb*HWP, K) f32

    # BatchNorm2d(16) eval-mode shift (scale already folded into the weight)
    featcov = conv + shift_ref[...]                              # (Bb*HWP, K)
    featcov_ref[...] = featcov.reshape(bb, hwp, k)

    # --- attention-weighted average pooling, per batch element ------------------
    #   fm[b, k, c] = (1/49) * sum_hw featcov[b, hw, k] * fmap[b, hw, c]
    # Padded hw rows of fmap are zero, so they contribute nothing to the sum.
    inv_hw = jnp.float32(1.0 / HW)

    def pool_body(b, carry):
        fcv_b = (featcov_ref[b] * inv_hw).astype(jnp.bfloat16)   # (HWP, K) tiny tile
        fm = jax.lax.dot_general(
            fcv_b, fmap_ref[b],
            dimension_numbers=(((0,), (0,)), ((), ())),
            preferred_element_type=jnp.float32)                  # (K, C) f32
        fm_ref[b] = fm
        return carry

    jax.lax.fori_loop(0, bb, pool_body, 0)


def _has_two_tensorcores():
    # v7x packs two TensorCores per chip; v5e/v6e have one.
    try:
        kind = jax.devices()[0].device_kind.lower()
    except Exception:
        return False
    return "v7" in kind


def _pick_block(B, two_tc):
    """Batch block Bb and padded batch.  Single fat step on single-TC chips,
    an even number (>=2) of balanced 'parallel' steps on dual-TC v7x."""
    cap = 8                                   # VMEM / vreg friendly per-step batch
    steps = -(-B // cap)                      # ceil(B / cap)
    if two_tc and B >= 2:
        steps = max(2, steps)
        steps += steps % 2                    # even step count -> both TCs balanced
    bb = -(-B // steps)                       # ceil(B / steps), minimal padding
    return bb, steps * bb


@jax.jit
def sam_forward(featmap_nchw, q_f, conv_w, bn_gamma, bn_beta, bn_mean, bn_var):
    B = featmap_nchw.shape[0]
    Bb, B_pad = _pick_block(B, _has_two_tensorcores())
    n_steps = B_pad // Bb

    # NCHW -> channels-minor (B, HW, C) bf16; transpose + cast (+ pad) fuse into a
    # single XLA pass over featmap.  HW padded 49 -> 56 with zero rows.
    fmap = jnp.transpose(featmap_nchw.reshape(B, C, HW), (0, 2, 1)).astype(jnp.bfloat16)
    fmap = jnp.pad(fmap, ((0, B_pad - B), (0, HWP - HW), (0, 0)))

    # Fold BatchNorm2d running stats; fold the scale into the conv weight.
    inv_std = 1.0 / jnp.sqrt(bn_var.astype(jnp.float32) + BN_EPS)
    scale = bn_gamma.astype(jnp.float32) * inv_std                        # (K,)
    shift = (bn_beta.astype(jnp.float32)
             - bn_mean.astype(jnp.float32) * scale).reshape(1, K)         # (1, K) f32

    # PyTorch conv weight [K, C, 1, 1] -> (C, K) so the conv matmul is MXU-native.
    w_ck = (conv_w.reshape(K, C).astype(jnp.float32)
            * scale[:, None]).T.astype(jnp.bfloat16)                      # (C, K)

    cost = pl.CostEstimate(
        flops=4 * B_pad * HWP * C * K,             # two matmuls, 2 flop / MAC
        transcendentals=0,
        bytes_accessed=(B_pad * HWP * C * 2        # featmap bf16 in
                        + C * K * 2                # weight bf16 in
                        + B_pad * HWP * K * 4      # featcov f32 out
                        + B_pad * K * C * 4))      # feat_matrix f32 out

    featcov_bhwk, feat_matrix = pl.pallas_call(
        _sam_head_kernel,
        out_shape=(
            jax.ShapeDtypeStruct((B_pad, HWP, K), jnp.float32),
            jax.ShapeDtypeStruct((B_pad, K, C), jnp.float32),
        ),
        grid_spec=pltpu.PrefetchScalarGridSpec(
            num_scalar_prefetch=0,
            grid=(n_steps,),
            in_specs=[
                pl.BlockSpec((Bb, HWP, C), lambda b: (b, 0, 0)),   # featmap block
                pl.BlockSpec((C, K), lambda b: (0, 0)),            # BN-scaled conv weight
                pl.BlockSpec((1, K), lambda b: (0, 0)),            # BN shift
            ],
            out_specs=[
                pl.BlockSpec((Bb, HWP, K), lambda b: (b, 0, 0)),   # featcov (HW-major)
                pl.BlockSpec((Bb, K, C), lambda b: (b, 0, 0)),     # feat_matrix
            ],
        ),
        compiler_params=pltpu.CompilerParams(
            dimension_semantics=("parallel",),
            vmem_limit_bytes=32 * 1024 * 1024),
        cost_estimate=cost,
    )(fmap, w_ck, shift)

    # Back to PyTorch conventions.  The featcov transpose is a tiny (B,49,16) op;
    # the dominant (B, 16*2048) output needs only a reshape.
    featcov16 = (featcov_bhwk[:B, :HW, :]
                 .transpose(0, 2, 1).reshape(B, K, H, W))
    bp_out_feat = feat_matrix[:B].reshape(B, K * C)
    return q_f, featmap_nchw, featcov16, bp_out_feat


if __name__ == "__main__":
    key = jax.random.PRNGKey(0)
    kf, kq, kw = jax.random.split(key, 3)

    B = 2
    # synthetic encoder outputs (the real encoder is an external ResNet)
    featmap = jax.random.normal(kf, (B, C, H, W), dtype=jnp.float32)
    q_f = jax.random.normal(kq, (B, 2048), dtype=jnp.float32)

    # conv16 = Conv2d(2048, 16, 1, bias=False): deterministic kaiming-style init
    conv_w = jax.random.normal(kw, (K, C, 1, 1), dtype=jnp.float32) * (2.0 / C) ** 0.5

    # bn16 = BatchNorm2d(16): fresh-init parameters / running stats (eval mode)
    bn_gamma = jnp.ones((K,), jnp.float32)
    bn_beta = jnp.zeros((K,), jnp.float32)
    bn_mean = jnp.zeros((K,), jnp.float32)
    bn_var = jnp.ones((K,), jnp.float32)

    outs = sam_forward(featmap, q_f, conv_w, bn_gamma, bn_beta, bn_mean, bn_var)
    q_f_o, featmap_o, featcov16, bp_out_feat = jax.block_until_ready(outs)

    # plain-JAX f32 reference check (kernel uses bf16 matmul inputs, f32 accum)
    inv_std = 1.0 / jnp.sqrt(bn_var + BN_EPS)
    scale = bn_gamma * inv_std
    shift = bn_beta - bn_mean * scale
    conv_ref = jnp.einsum("bchw,kc->bkhw", featmap, conv_w.reshape(K, C),
                          precision=jax.lax.Precision.HIGHEST)
    featcov_ref = conv_ref * scale[None, :, None, None] + shift[None, :, None, None]
    fm_ref = jnp.einsum("bkhw,bchw->bkc", featcov_ref, featmap,
                        precision=jax.lax.Precision.HIGHEST) / HW
    bp_ref = fm_ref.reshape(B, K * C)

    assert featcov16.shape == (B, K, H, W)
    assert bp_out_feat.shape == (B, K * C)
    assert jnp.allclose(featcov16, featcov_ref, rtol=5e-2, atol=5e-2)
    assert jnp.allclose(bp_out_feat, bp_ref, rtol=5e-2, atol=5e-2)

    print("KERNEL_OK")
</pallas_src>

<mosaic_0001>
module attributes {stable_mosaic.version = 11 : i64} {
  func.func @_sam_head_kernel(%arg0: i32, %arg1: memref<2x56x2048xbf16, #tpu.memory_space<vmem>>, %arg2: memref<2048x16xbf16, #tpu.memory_space<vmem>>, %arg3: memref<1x16xf32, #tpu.memory_space<vmem>>, %arg4: memref<2x56x16xf32, #tpu.memory_space<vmem>>, %arg5: memref<2x16x2048xf32, #tpu.memory_space<vmem>>) attributes {dimension_semantics = [#tpu.dimension_semantics<parallel>], iteration_bounds = array<i64: 1>, scalar_prefetch = 0 : i64, scratch_operands = 0 : i64, tpu.core_type = #tpu.core_type<tc>, window_params = [{transform_indices = @transform_0, window_bounds = array<i64: 2, 56, 2048>}, {pipeline_mode = #tpu.pipeline_mode<synchronous>, transform_indices = @transform_1, window_bounds = array<i64: 2048, 16>}, {pipeline_mode = #tpu.pipeline_mode<synchronous>, transform_indices = @transform_2, window_bounds = array<i64: 1, 16>}, {transform_indices = @transform_3, window_bounds = array<i64: 2, 56, 16>}, {transform_indices = @transform_4, window_bounds = array<i64: 2, 16, 2048>}]} {
    %c0 = arith.constant 0 : index
    %c0_0 = arith.constant 0 : index
    %c0_1 = arith.constant 0 : index
    %0 = vector.load %arg1[%c0, %c0_0, %c0_1] : memref<2x56x2048xbf16, #tpu.memory_space<vmem>>, vector<2x56x2048xbf16>
    %1 = vector.shape_cast %0 : vector<2x56x2048xbf16> to vector<112x2048xbf16>
    %c0_2 = arith.constant 0 : index
    %c0_3 = arith.constant 0 : index
    %2 = vector.load %arg2[%c0_2, %c0_3] : memref<2048x16xbf16, #tpu.memory_space<vmem>>, vector<2048x16xbf16>
    %cst = arith.constant dense<0.000000e+00> : vector<112x16xf32>
    %3 = tpu.matmul %1, %2, %cst {dimension_numbers = #tpu.dot_dimension_numbers<[1], [0], [0], [1], [0, 0, 1, 1], [], []>} : vector<112x2048xbf16>, vector<2048x16xbf16>, vector<112x16xf32> -> vector<112x16xf32>
    %c0_4 = arith.constant 0 : index
    %c0_5 = arith.constant 0 : index
    %4 = vector.load %arg3[%c0_4, %c0_5] : memref<1x16xf32, #tpu.memory_space<vmem>>, vector<1x16xf32>
    %5 = vector.broadcast %4 : vector<1x16xf32> to vector<112x16xf32>
    %6 = arith.addf %3, %5 : vector<112x16xf32>
    %7 = vector.shape_cast %6 : vector<112x16xf32> to vector<2x56x16xf32>
    %c0_6 = arith.constant 0 : index
    %c0_7 = arith.constant 0 : index
    %c0_8 = arith.constant 0 : index
    %8 = vector.load %arg4[%c0_6, %c0_7, %c0_8] : memref<2x56x16xf32, #tpu.memory_space<vmem>>, vector<2x56x16xf32>
    tpu.vector_store %arg4[%c0_6, %c0_7, %c0_8], %7 {strides = array<i32>} : memref<2x56x16xf32, #tpu.memory_space<vmem>>, vector<2x56x16xf32>,
    %cst_9 = arith.constant 0.0204081628 : f32
    %c0_i32 = arith.constant 0 : i32
    %c2_i32 = arith.constant 2 : i32
    %9 = arith.addi %c0_i32, %c2_i32 : i32
    %c1_i32 = arith.constant 1 : i32
    scf.for %arg6 = %c0_i32 to %9 step %c1_i32  : i32 {
      %10 = arith.index_cast %arg6 : i32 to index
      %c0_11 = arith.constant 0 : index
      %c0_12 = arith.constant 0 : index
      %11 = vector.load %arg4[%10, %c0_11, %c0_12] : memref<2x56x16xf32, #tpu.memory_space<vmem>>, vector<1x56x16xf32>
      %12 = vector.shape_cast %11 : vector<1x56x16xf32> to vector<56x16xf32>
      %13 = vector.broadcast %cst_9 : f32 to vector<56x16xf32>
      %14 = arith.mulf %12, %13 : vector<56x16xf32>
      %15 = arith.truncf %14 : vector<56x16xf32> to vector<56x16xbf16>
      %16 = arith.index_cast %arg6 : i32 to index
      %c0_13 = arith.constant 0 : index
      %c0_14 = arith.constant 0 : index
      %17 = vector.load %arg1[%16, %c0_13, %c0_14] : memref<2x56x2048xbf16, #tpu.memory_space<vmem>>, vector<1x56x2048xbf16>
      %18 = vector.shape_cast %17 : vector<1x56x2048xbf16> to vector<56x2048xbf16>
      %cst_15 = arith.constant dense<0.000000e+00> : vector<16x2048xf32>
      %19 = tpu.matmul %15, %18, %cst_15 {dimension_numbers = #tpu.dot_dimension_numbers<[0], [0], [1], [1], [0, 1, 1, 1], [], []>} : vector<56x16xbf16>, vector<56x2048xbf16>, vector<16x2048xf32> -> vector<16x2048xf32>
      %20 = arith.index_cast %arg6 : i32 to index
      %c0_16 = arith.constant 0 : index
      %c0_17 = arith.constant 0 : index
      %21 = vector.load %arg5[%20, %c0_16, %c0_17] : memref<2x16x2048xf32, #tpu.memory_space<vmem>>, vector<1x16x2048xf32>
      %22 = vector.shape_cast %21 : vector<1x16x2048xf32> to vector<16x2048xf32>
      %23 = vector.shape_cast %19 : vector<16x2048xf32> to vector<1x16x2048xf32>
      tpu.vector_store %arg5[%20, %c0_16, %c0_17], %23 {strides = array<i32>} : memref<2x16x2048xf32, #tpu.memory_space<vmem>>, vector<1x16x2048xf32>,
    }
    %c2_i32_10 = arith.constant 2 : i32
    return
  }
  func.func @transform_0(%arg0: i32) -> (i32, i32, i32) {
    %c0_i32 = arith.constant 0 : i32
    %c0_i32_0 = arith.constant 0 : i32
    %c0_i32_1 = arith.constant 0 : i32
    return %arg0, %c0_i32, %c0_i32_0 : i32, i32, i32
  }
  func.func @transform_1(%arg0: i32) -> (i32, i32) {
    %c0_i32 = arith.constant 0 : i32
    %c0_i32_0 = arith.constant 0 : i32
    %c0_i32_1 = arith.constant 0 : i32
    return %c0_i32, %c0_i32_0 : i32, i32
  }
  func.func @transform_2(%arg0: i32) -> (i32, i32) {
    %c0_i32 = arith.constant 0 : i32
    %c0_i32_0 = arith.constant 0 : i32
    %c0_i32_1 = arith.constant 0 : i32
    return %c0_i32, %c0_i32_0 : i32, i32
  }
  func.func @transform_3(%arg0: i32) -> (i32, i32, i32) {
    %c0_i32 = arith.constant 0 : i32
    %c0_i32_0 = arith.constant 0 : i32
    %c0_i32_1 = arith.constant 0 : i32
    return %arg0, %c0_i32, %c0_i32_0 : i32, i32, i32
  }
  func.func @transform_4(%arg0: i32) -> (i32, i32, i32) {
    %c0_i32 = arith.constant 0 : i32
    %c0_i32_0 = arith.constant 0 : i32
    %c0_i32_1 = arith.constant 0 : i32
    return %arg0, %c0_i32, %c0_i32_0 : i32, i32, i32
  }
}

</mosaic_0001>

<llo_original>
// kernel: sam_forward.1
$region0: #{sam_forward.1}
  #allocation0 [shape = 'u32[]', space=smem, size = 0x4, offset = 0x4, fixed_abs, tag = 'smem constant byte address 0x4 - core index']
  #allocation1 [shape = 'u32[144,128]{1,0:T(1,128)}', space=vmem, size = 0x12000, scoped, tag = 'internal scratch']
  %s0 = inlined_call_operand.vmem [shape: bf16[2,56,2048], index: 0, kind: input, shape index: {}]
  %s1 = inlined_call_operand.vmem [shape: bf16[2048,16], index: 1, kind: input, shape index: {}]
  %s2 = inlined_call_operand.vmem [shape: f32[1,16], index: 2, kind: input, shape index: {}]
  %s3 = inlined_call_operand.vmem [shape: f32[2,56,16], index: 3, kind: output, shape index: {0}]
  %s4 = inlined_call_operand.vmem [shape: f32[2,16,2048], index: 4, kind: output, shape index: {1}]
  %5 = xla_tuple %s3, %s4
  %s6 = sld [smem:[#allocation0]]
  $region37: #{sam_forward.1} parent=0
    _
  %s8 = ssub.s32 1, %s6
  %s9 = scalar_select 0, %s8, %s6
  // Predicated region
  $region2: #{sam_forward.1} parent=0 // pred_check
    _
  $region3: #{sam_forward.1} parent=0 // pred_check_branch
    %11 = sbr.rel (0) target = $region5
  $region4: #{sam_forward.1} parent=0 // pred_region
    _
  $region5: #{sam_forward.1} parent=0 // pred_fallthru
    _
  // Predicated region
  $region6: #{sam_forward.1} parent=0 // pred_check
    _
  $region7: #{sam_forward.1} parent=0 // pred_check_branch
    %13 = sbr.rel (0) target = $region9
  $region8: #{sam_forward.1} parent=0 // pred_region
    _
  $region9: #{sam_forward.1} parent=0 // pred_fallthru
    _
  // Predicated region
  $region10: #{sam_forward.1} parent=0 // pred_check
    _
  $region11: #{sam_forward.1} parent=0 // pred_check_branch
    %15 = sbr.rel (0) target = $region13
  $region12: #{sam_forward.1} parent=0 // pred_region
    _
  $region13: #{sam_forward.1} parent=0 // pred_fallthru
    _
  %v17 = vld [vmem:[%s0] sm:$0xff]
  %v18 = vld [vmem:[%s0 + $0x8] sm:$0xff]
  %v19 = vld [vmem:[%s0 + $0x10] sm:$0xff]
  %v20 = vld [vmem:[%s0 + $0x18] sm:$0xff]
  %v21 = vld [vmem:[%s0 + $0x20] sm:$0xff]
  %v22 = vld [vmem:[%s0 + $0x28] sm:$0xff]
  %v23 = vld [vmem:[%s0 + $0x30] sm:$0xff]
  %v24 = vld [vmem:[%s0 + $0x38] sm:$0xff]
  %v25 = vld [vmem:[%s0 + $0x40] sm:$0xff]
  %v26 = vld [vmem:[%s0 + $0x48] sm:$0xff]
  %v27 = vld [vmem:[%s0 + $0x50] sm:$0xff]
  %v28 = vld [vmem:[%s0 + $0x58] sm:$0xff]
  %v29 = vld [vmem:[%s0 + $0x60] sm:$0xff]
  %v30 = vld [vmem:[%s0 + $0x68] sm:$0xff]
  %v31 = vld [vmem:[%s0 + $0x70] sm:$0xff]
  %v32 = vld [vmem:[%s0 + $0x78] sm:$0xff]
  %v33 = vld [vmem:[%s0 + $0x80] sm:$0xff]
  %v34 = vld [vmem:[%s0 + $0x88] sm:$0xff]
  %v35 = vld [vmem:[%s0 + $0x90] sm:$0xff]
  %v36 = vld [vmem:[%s0 + $0x98] sm:$0xff]
  %v37 = vld [vmem:[%s0 + $0xa0] sm:$0xff]
  %v38 = vld [vmem:[%s0 + $0xa8] sm:$0xff]
  %v39 = vld [vmem:[%s0 + $0xb0] sm:$0xff]
  %v40 = vld [vmem:[%s0 + $0xb8] sm:$0xff]
  %v41 = vld [vmem:[%s0 + $0xc0] sm:$0xff]
  %v42 = vld [vmem:[%s0 + $0xc8] sm:$0xff]
  %v43 = vld [vmem:[%s0 + $0xd0] sm:$0xff]
  %v44 = vld [vmem:[%s0 + $0xd8] sm:$0xff]
  %v45 = vld [vmem:[%s0 + $0xe0] sm:$0xff]
  %v46 = vld [vmem:[%s0 + $0xe8] sm:$0xff]
  %v47 = vld [vmem:[%s0 + $0xf0] sm:$0xff]
  %v48 = vld [vmem:[%s0 + $0xf8] sm:$0xff]
  %v49 = vld [vmem:[%s0 + $0x100] sm:$0xff]
  %v50 = vld [vmem:[%s0 + $0x108] sm:$0xff]
  %v51 = vld [vmem:[%s0 + $0x110] sm:$0xff]
  %v52 = vld [vmem:[%s0 + $0x118] sm:$0xff]
  %v53 = vld [vmem:[%s0 + $0x120] sm:$0xff]
  %v54 = vld [vmem:[%s0 + $0x128] sm:$0xff]
  %v55 = vld [vmem:[%s0 + $0x130] sm:$0xff]
  %v56 = vld [vmem:[%s0 + $0x138] sm:$0xff]
  %v57 = vld [vmem:[%s0 + $0x140] sm:$0xff]
  %v58 = vld [vmem:[%s0 + $0x148] sm:$0xff]
  %v59 = vld [vmem:[%s0 + $0x150] sm:$0xff]
  %v60 = vld [vmem:[%s0 + $0x158] sm:$0xff]
  %v61 = vld [vmem:[%s0 + $0x160] sm:$0xff]
  %v62 = vld [vmem:[%s0 + $0x168] sm:$0xff]
  %v63 = vld [vmem:[%s0 + $0x170] sm:$0xff]
  %v64 = vld [vmem:[%s0 + $0x178] sm:$0xff]
  %v65 = vld [vmem:[%s0 + $0x180] sm:$0xff]
  %v66 = vld [vmem:[%s0 + $0x188] sm:$0xff]
  %v67 = vld [vmem:[%s0 + $0x190] sm:$0xff]
  %v68 = vld [vmem:[%s0 + $0x198] sm:$0xff]
  %v69 = vld [vmem:[%s0 + $0x1a0] sm:$0xff]
  %v70 = vld [vmem:[%s0 + $0x1a8] sm:$0xff]
  %v71 = vld [vmem:[%s0 + $0x1b0] sm:$0xff]
  %v72 = vld [vmem:[%s0 + $0x1b8] sm:$0xff]
  %v73 = vld [vmem:[%s0 + $0x1c0] sm:$0xff]
  %v74 = vld [vmem:[%s0 + $0x1c8] sm:$0xff]
  %v75 = vld [vmem:[%s0 + $0x1d0] sm:$0xff]
  %v76 = vld [vmem:[%s0 + $0x1d8] sm:$0xff]
  %v77 = vld [vmem:[%s0 + $0x1e0] sm:$0xff]
  %v78 = vld [vmem:[%s0 + $0x1e8] sm:$0xff]
  %v79 = vld [vmem:[%s0 + $0x1f0] sm:$0xff]
  %v80 = vld [vmem:[%s0 + $0x1f8] sm:$0xff]
  %v81 = vld [vmem:[%s0 + $0x200] sm:$0xff]
  %v82 = vld [vmem:[%s0 + $0x208] sm:$0xff]
  %v83 = vld [vmem:[%s0 + $0x210] sm:$0xff]
  %v84 = vld [vmem:[%s0 + $0x218] sm:$0xff]
  %v85 = vld [vmem:[%s0 + $0x220] sm:$0xff]
  %v86 = vld [vmem:[%s0 + $0x228] sm:$0xff]
  %v87 = vld [vmem:[%s0 + $0x230] sm:$0xff]
  %v88 = vld [vmem:[%s0 + $0x238] sm:$0xff]
  %v89 = vld [vmem:[%s0 + $0x240] sm:$0xff]
  %v90 = vld [vmem:[%s0 + $0x248] sm:$0xff]
  %v91 = vld [vmem:[%s0 + $0x250] sm:$0xff]
  %v92 = vld [vmem:[%s0 + $0x258] sm:$0xff]
  %v93 = vld [vmem:[%s0 + $0x260] sm:$0xff]
  %v94 = vld [vmem:[%s0 + $0x268] sm:$0xff]
  %v95 = vld [vmem:[%s0 + $0x270] sm:$0xff]
  %v96 = vld [vmem:[%s0 + $0x278] sm:$0xff]
  %v97 = vld [vmem:[%s0 + $0x280] sm:$0xff]
  %v98 = vld [vmem:[%s0 + $0x288] sm:$0xff]
  %v99 = vld [vmem:[%s0 + $0x290] sm:$0xff]
  %v100 = vld [vmem:[%s0 + $0x298] sm:$0xff]
  %v101 = vld [vmem:[%s0 + $0x2a0] sm:$0xff]
  %v102 = vld [vmem:[%s0 + $0x2a8] sm:$0xff]
  %v103 = vld [vmem:[%s0 + $0x2b0] sm:$0xff]
  %v104 = vld [vmem:[%s0 + $0x2b8] sm:$0xff]
  %v105 = vld [vmem:[%s0 + $0x2c0] sm:$0xff]
  %v106 = vld [vmem:[%s0 + $0x2c8] sm:$0xff]
  %v107 = vld [vmem:[%s0 + $0x2d0] sm:$0xff]
  %v108 = vld [vmem:[%s0 + $0x2d8] sm:$0xff]
  %v109 = vld [vmem:[%s0 + $0x2e0] sm:$0xff]
  %v110 = vld [vmem:[%s0 + $0x2e8] sm:$0xff]
  %v111 = vld [vmem:[%s0 + $0x2f0] sm:$0xff]
  %v112 = vld [vmem:[%s0 + $0x2f8] sm:$0xff]
  %v113 = vld [vmem:[%s0 + $0x300] sm:$0xff]
  %v114 = vld [vmem:[%s0 + $0x308] sm:$0xff]
  %v115 = vld [vmem:[%s0 + $0x310] sm:$0xff]
  %v116 = vld [vmem:[%s0 + $0x318] sm:$0xff]
  %v117 = vld [vmem:[%s0 + $0x320] sm:$0xff]
  %v118 = vld [vmem:[%s0 + $0x328] sm:$0xff]
  %v119 = vld [vmem:[%s0 + $0x330] sm:$0xff]
  %v120 = vld [vmem:[%s0 + $0x338] sm:$0xff]
  %v121 = vld [vmem:[%s0 + $0x340] sm:$0xff]
  %v122 = vld [vmem:[%s0 + $0x348] sm:$0xff]
  %v123 = vld [vmem:[%s0 + $0x350] sm:$0xff]
  %v124 = vld [vmem:[%s0 + $0x358] sm:$0xff]
  %v125 = vld [vmem:[%s0 + $0x360] sm:$0xff]
  %v126 = vld [vmem:[%s0 + $0x368] sm:$0xff]
  %v127 = vld [vmem:[%s0 + $0x370] sm:$0xff]
  %v128 = vld [vmem:[%s0 + $0x378] sm:$0xff]
  %v129 = vld [vmem:[%s1] sm:$0xf]
  %v130 = vld [vmem:[%s1 + $0x4] sm:$0xf]
  %v131 = vld [vmem:[%s1 + $0x8] sm:$0xf]
  %v132 = vld [vmem:[%s1 + $0xc] sm:$0xf]
  %v133 = vld [vmem:[%s1 + $0x10] sm:$0xf]
  %v134 = vld [vmem:[%s1 + $0x14] sm:$0xf]
  %v135 = vld [vmem:[%s1 + $0x18] sm:$0xf]
  %v136 = vld [vmem:[%s1 + $0x1c] sm:$0xf]
  %v137 = vld [vmem:[%s1 + $0x20] sm:$0xf]
  %v138 = vld [vmem:[%s1 + $0x24] sm:$0xf]
  %v139 = vld [vmem:[%s1 + $0x28] sm:$0xf]
  %v140 = vld [vmem:[%s1 + $0x2c] sm:$0xf]
  %v141 = vld [vmem:[%s1 + $0x30] sm:$0xf]
  %v142 = vld [vmem:[%s1 + $0x34] sm:$0xf]
  %v143 = vld [vmem:[%s1 + $0x38] sm:$0xf]
  %v144 = vld [vmem:[%s1 + $0x3c] sm:$0xf]
  %v145 = vld [vmem:[%s1 + $0x40] sm:$0xf]
  %v146 = vld [vmem:[%s1 + $0x44] sm:$0xf]
  %v147 = vld [vmem:[%s1 + $0x48] sm:$0xf]
  %v148 = vld [vmem:[%s1 + $0x4c] sm:$0xf]
  %v149 = vld [vmem:[%s1 + $0x50] sm:$0xf]
  %v150 = vld [vmem:[%s1 + $0x54] sm:$0xf]
  %v151 = vld [vmem:[%s1 + $0x58] sm:$0xf]
  %v152 = vld [vmem:[%s1 + $0x5c] sm:$0xf]
  %v153 = vld [vmem:[%s1 + $0x60] sm:$0xf]
  %v154 = vld [vmem:[%s1 + $0x64] sm:$0xf]
  %v155 = vld [vmem:[%s1 + $0x68] sm:$0xf]
  %v156 = vld [vmem:[%s1 + $0x6c] sm:$0xf]
  %v157 = vld [vmem:[%s1 + $0x70] sm:$0xf]
  %v158 = vld [vmem:[%s1 + $0x74] sm:$0xf]
  %v159 = vld [vmem:[%s1 + $0x78] sm:$0xf]
  %v160 = vld [vmem:[%s1 + $0x7c] sm:$0xf]
  %v161 = vld [vmem:[%s1 + $0x80] sm:$0xf]
  %v162 = vld [vmem:[%s1 + $0x84] sm:$0xf]
  %v163 = vld [vmem:[%s1 + $0x88] sm:$0xf]
  %v164 = vld [vmem:[%s1 + $0x8c] sm:$0xf]
  %v165 = vld [vmem:[%s1 + $0x90] sm:$0xf]
  %v166 = vld [vmem:[%s1 + $0x94] sm:$0xf]
  %v167 = vld [vmem:[%s1 + $0x98] sm:$0xf]
  %v168 = vld [vmem:[%s1 + $0x9c] sm:$0xf]
  %v169 = vld [vmem:[%s1 + $0xa0] sm:$0xf]
  %v170 = vld [vmem:[%s1 + $0xa4] sm:$0xf]
  %v171 = vld [vmem:[%s1 + $0xa8] sm:$0xf]
  %v172 = vld [vmem:[%s1 + $0xac] sm:$0xf]
  %v173 = vld [vmem:[%s1 + $0xb0] sm:$0xf]
  %v174 = vld [vmem:[%s1 + $0xb4] sm:$0xf]
  %v175 = vld [vmem:[%s1 + $0xb8] sm:$0xf]
  %v176 = vld [vmem:[%s1 + $0xbc] sm:$0xf]
  %v177 = vld [vmem:[%s1 + $0xc0] sm:$0xf]
  %v178 = vld [vmem:[%s1 + $0xc4] sm:$0xf]
  %v179 = vld [vmem:[%s1 + $0xc8] sm:$0xf]
  %v180 = vld [vmem:[%s1 + $0xcc] sm:$0xf]
  %v181 = vld [vmem:[%s1 + $0xd0] sm:$0xf]
  %v182 = vld [vmem:[%s1 + $0xd4] sm:$0xf]
  %v183 = vld [vmem:[%s1 + $0xd8] sm:$0xf]
  %v184 = vld [vmem:[%s1 + $0xdc] sm:$0xf]
  %v185 = vld [vmem:[%s1 + $0xe0] sm:$0xf]
  %v186 = vld [vmem:[%s1 + $0xe4] sm:$0xf]
  %v187 = vld [vmem:[%s1 + $0xe8] sm:$0xf]
  %v188 = vld [vmem:[%s1 + $0xec] sm:$0xf]
  %v189 = vld [vmem:[%s1 + $0xf0] sm:$0xf]
  %v190 = vld [vmem:[%s1 + $0xf4] sm:$0xf]
  %v191 = vld [vmem:[%s1 + $0xf8] sm:$0xf]
  %v192 = vld [vmem:[%s1 + $0xfc] sm:$0xf]
  %v193 = vld [vmem:[%s1 + $0x100] sm:$0xf]
  %v194 = vld [vmem:[%s1 + $0x104] sm:$0xf]
  %v195 = vld [vmem:[%s1 + $0x108] sm:$0xf]
  %v196 = vld [vmem:[%s1 + $0x10c] sm:$0xf]
  %v197 = vld [vmem:[%s1 + $0x110] sm:$0xf]
  %v198 = vld [vmem:[%s1 + $0x114] sm:$0xf]
  %v199 = vld [vmem:[%s1 + $0x118] sm:$0xf]
  %v200 = vld [vmem:[%s1 + $0x11c] sm:$0xf]
  %v201 = vld [vmem:[%s1 + $0x120] sm:$0xf]
  %v202 = vld [vmem:[%s1 + $0x124] sm:$0xf]
  %v203 = vld [vmem:[%s1 + $0x128] sm:$0xf]
  %v204 = vld [vmem:[%s1 + $0x12c] sm:$0xf]
  %v205 = vld [vmem:[%s1 + $0x130] sm:$0xf]
  %v206 = vld [vmem:[%s1 + $0x134] sm:$0xf]
  %v207 = vld [vmem:[%s1 + $0x138] sm:$0xf]
  %v208 = vld [vmem:[%s1 + $0x13c] sm:$0xf]
  %v209 = vld [vmem:[%s1 + $0x140] sm:$0xf]
  %v210 = vld [vmem:[%s1 + $0x144] sm:$0xf]
  %v211 = vld [vmem:[%s1 + $0x148] sm:$0xf]
  %v212 = vld [vmem:[%s1 + $0x14c] sm:$0xf]
  %v213 = vld [vmem:[%s1 + $0x150] sm:$0xf]
  %v214 = vld [vmem:[%s1 + $0x154] sm:$0xf]
  %v215 = vld [vmem:[%s1 + $0x158] sm:$0xf]
  %v216 = vld [vmem:[%s1 + $0x15c] sm:$0xf]
  %v217 = vld [vmem:[%s1 + $0x160] sm:$0xf]
  %v218 = vld [vmem:[%s1 + $0x164] sm:$0xf]
  %v219 = vld [vmem:[%s1 + $0x168] sm:$0xf]
  %v220 = vld [vmem:[%s1 + $0x16c] sm:$0xf]
  %v221 = vld [vmem:[%s1 + $0x170] sm:$0xf]
  %v222 = vld [vmem:[%s1 + $0x174] sm:$0xf]
  %v223 = vld [vmem:[%s1 + $0x178] sm:$0xf]
  %v224 = vld [vmem:[%s1 + $0x17c] sm:$0xf]
  %v225 = vld [vmem:[%s1 + $0x180] sm:$0xf]
  %v226 = vld [vmem:[%s1 + $0x184] sm:$0xf]
  %v227 = vld [vmem:[%s1 + $0x188] sm:$0xf]
  %v228 = vld [vmem:[%s1 + $0x18c] sm:$0xf]
  %v229 = vld [vmem:[%s1 + $0x190] sm:$0xf]
  %v230 = vld [vmem:[%s1 + $0x194] sm:$0xf]
  %v231 = vld [vmem:[%s1 + $0x198] sm:$0xf]
  %v232 = vld [vmem:[%s1 + $0x19c] sm:$0xf]
  %v233 = vld [vmem:[%s1 + $0x1a0] sm:$0xf]
  %v234 = vld [vmem:[%s1 + $0x1a4] sm:$0xf]
  %v235 = vld [vmem:[%s1 + $0x1a8] sm:$0xf]
  %v236 = vld [vmem:[%s1 + $0x1ac] sm:$0xf]
  %v237 = vld [vmem:[%s1 + $0x1b0] sm:$0xf]
  %v238 = vld [vmem:[%s1 + $0x1b4] sm:$0xf]
  %v239 = vld [vmem:[%s1 + $0x1b8] sm:$0xf]
  %v240 = vld [vmem:[%s1 + $0x1bc] sm:$0xf]
  %v241 = vld [vmem:[%s1 + $0x1c0] sm:$0xf]
  %v242 = vld [vmem:[%s1 + $0x1c4] sm:$0xf]
  %v243 = vld [vmem:[%s1 + $0x1c8] sm:$0xf]
  %v244 = vld [vmem:[%s1 + $0x1cc] sm:$0xf]
  %v245 = vld [vmem:[%s1 + $0x1d0] sm:$0xf]
  %v246 = vld [vmem:[%s1 + $0x1d4] sm:$0xf]
  %v247 = vld [vmem:[%s1 + $0x1d8] sm:$0xf]
  %v248 = vld [vmem:[%s1 + $0x1dc] sm:$0xf]
  %v249 = vld [vmem:[%s1 + $0x1e0] sm:$0xf]
  %v250 = vld [vmem:[%s1 + $0x1e4] sm:$0xf]
  %v251 = vld [vmem:[%s1 + $0x1e8] sm:$0xf]
  %v252 = vld [vmem:[%s1 + $0x1ec] sm:$0xf]
  %v253 = vld [vmem:[%s1 + $0x1f0] sm:$0xf]
  %v254 = vld [vmem:[%s1 + $0x1f4] sm:$0xf]
  %v255 = vld [vmem:[%s1 + $0x1f8] sm:$0xf]
  %v256 = vld [vmem:[%s1 + $0x1fc] sm:$0xf]
  %v257 = vld [vmem:[%s1 + $0x200] sm:$0xf]
  %v258 = vld [vmem:[%s1 + $0x204] sm:$0xf]
  %v259 = vld [vmem:[%s1 + $0x208] sm:$0xf]
  %v260 = vld [vmem:[%s1 + $0x20c] sm:$0xf]
  %v261 = vld [vmem:[%s1 + $0x210] sm:$0xf]
  %v262 = vld [vmem:[%s1 + $0x214] sm:$0xf]
  %v263 = vld [vmem:[%s1 + $0x218] sm:$0xf]
  %v264 = vld [vmem:[%s1 + $0x21c] sm:$0xf]
  %v265 = vld [vmem:[%s1 + $0x220] sm:$0xf]
  %v266 = vld [vmem:[%s1 + $0x224] sm:$0xf]
  %v267 = vld [vmem:[%s1 + $0x228] sm:$0xf]
  %v268 = vld [vmem:[%s1 + $0x22c] sm:$0xf]
  %v269 = vld [vmem:[%s1 + $0x230] sm:$0xf]
  %v270 = vld [vmem:[%s1 + $0x234] sm:$0xf]
  %v271 = vld [vmem:[%s1 + $0x238] sm:$0xf]
  %v272 = vld [vmem:[%s1 + $0x23c] sm:$0xf]
  %v273 = vld [vmem:[%s1 + $0x240] sm:$0xf]
  %v274 = vld [vmem:[%s1 + $0x244] sm:$0xf]
  %v275 = vld [vmem:[%s1 + $0x248] sm:$0xf]
  %v276 = vld [vmem:[%s1 + $0x24c] sm:$0xf]
  %v277 = vld [vmem:[%s1 + $0x250] sm:$0xf]
  %v278 = vld [vmem:[%s1 + $0x254] sm:$0xf]
  %v279 = vld [vmem:[%s1 + $0x258] sm:$0xf]
  %v280 = vld [vmem:[%s1 + $0x25c] sm:$0xf]
  %v281 = vld [vmem:[%s1 + $0x260] sm:$0xf]
  %v282 = vld [vmem:[%s1 + $0x264] sm:$0xf]
  %v283 = vld [vmem:[%s1 + $0x268] sm:$0xf]
  %v284 = vld [vmem:[%s1 + $0x26c] sm:$0xf]
  %v285 = vld [vmem:[%s1 + $0x270] sm:$0xf]
  %v286 = vld [vmem:[%s1 + $0x274] sm:$0xf]
  %v287 = vld [vmem:[%s1 + $0x278] sm:$0xf]
  %v288 = vld [vmem:[%s1 + $0x27c] sm:$0xf]
  %v289 = vld [vmem:[%s1 + $0x280] sm:$0xf]
  %v290 = vld [vmem:[%s1 + $0x284] sm:$0xf]
  %v291 = vld [vmem:[%s1 + $0x288] sm:$0xf]
  %v292 = vld [vmem:[%s1 + $0x28c] sm:$0xf]
  %v293 = vld [vmem:[%s1 + $0x290] sm:$0xf]
  %v294 = vld [vmem:[%s1 + $0x294] sm:$0xf]
  %v295 = vld [vmem:[%s1 + $0x298] sm:$0xf]
  %v296 = vld [vmem:[%s1 + $0x29c] sm:$0xf]
  %v297 = vld [vmem:[%s1 + $0x2a0] sm:$0xf]
  %v298 = vld [vmem:[%s1 + $0x2a4] sm:$0xf]
  %v299 = vld [vmem:[%s1 + $0x2a8] sm:$0xf]
  %v300 = vld [vmem:[%s1 + $0x2ac] sm:$0xf]
  %v301 = vld [vmem:[%s1 + $0x2b0] sm:$0xf]
  %v302 = vld [vmem:[%s1 + $0x2b4] sm:$0xf]
  %v303 = vld [vmem:[%s1 + $0x2b8] sm:$0xf]
  %v304 = vld [vmem:[%s1 + $0x2bc] sm:$0xf]
  %v305 = vld [vmem:[%s1 + $0x2c0] sm:$0xf]
  %v306 = vld [vmem:[%s1 + $0x2c4] sm:$0xf]
  %v307 = vld [vmem:[%s1 + $0x2c8] sm:$0xf]
  %v308 = vld [vmem:[%s1 + $0x2cc] sm:$0xf]
  %v309 = vld [vmem:[%s1 + $0x2d0] sm:$0xf]
  %v310 = vld [vmem:[%s1 + $0x2d4] sm:$0xf]
  %v311 = vld [vmem:[%s1 + $0x2d8] sm:$0xf]
  %v312 = vld [vmem:[%s1 + $0x2dc] sm:$0xf]
  %v313 = vld [vmem:[%s1 + $0x2e0] sm:$0xf]
  %v314 = vld [vmem:[%s1 + $0x2e4] sm:$0xf]
  %v315 = vld [vmem:[%s1 + $0x2e8] sm:$0xf]
  %v316 = vld [vmem:[%s1 + $0x2ec] sm:$0xf]
  %v317 = vld [vmem:[%s1 + $0x2f0] sm:$0xf]
  %v318 = vld [vmem:[%s1 + $0x2f4] sm:$0xf]
  %v319 = vld [vmem:[%s1 + $0x2f8] sm:$0xf]
  %v320 = vld [vmem:[%s1 + $0x2fc] sm:$0xf]
  %v321 = vld [vmem:[%s1 + $0x300] sm:$0xf]
  %v322 = vld [vmem:[%s1 + $0x304] sm:$0xf]
  %v323 = vld [vmem:[%s1 + $0x308] sm:$0xf]
  %v324 = vld [vmem:[%s1 + $0x30c] sm:$0xf]
  %v325 = vld [vmem:[%s1 + $0x310] sm:$0xf]
  %v326 = vld [vmem:[%s1 + $0x314] sm:$0xf]
  %v327 = vld [vmem:[%s1 + $0x318] sm:$0xf]
  %v328 = vld [vmem:[%s1 + $0x31c] sm:$0xf]
  %v329 = vld [vmem:[%s1 + $0x320] sm:$0xf]
  %v330 = vld [vmem:[%s1 + $0x324] sm:$0xf]
  %v331 = vld [vmem:[%s1 + $0x328] sm:$0xf]
  %v332 = vld [vmem:[%s1 + $0x32c] sm:$0xf]
  %v333 = vld [vmem:[%s1 + $0x330] sm:$0xf]
  %v334 = vld [vmem:[%s1 + $0x334] sm:$0xf]
  %v335 = vld [vmem:[%s1 + $0x338] sm:$0xf]
  %v336 = vld [vmem:[%s1 + $0x33c] sm:$0xf]
  %v337 = vld [vmem:[%s1 + $0x340] sm:$0xf]
  %v338 = vld [vmem:[%s1 + $0x344] sm:$0xf]
  %v339 = vld [vmem:[%s1 + $0x348] sm:$0xf]
  %v340 = vld [vmem:[%s1 + $0x34c] sm:$0xf]
  %v341 = vld [vmem:[%s1 + $0x350] sm:$0xf]
  %v342 = vld [vmem:[%s1 + $0x354] sm:$0xf]
  %v343 = vld [vmem:[%s1 + $0x358] sm:$0xf]
  %v344 = vld [vmem:[%s1 + $0x35c] sm:$0xf]
  %v345 = vld [vmem:[%s1 + $0x360] sm:$0xf]
  %v346 = vld [vmem:[%s1 + $0x364] sm:$0xf]
  %v347 = vld [vmem:[%s1 + $0x368] sm:$0xf]
  %v348 = vld [vmem:[%s1 + $0x36c] sm:$0xf]
  %v349 = vld [vmem:[%s1 + $0x370] sm:$0xf]
  %v350 = vld [vmem:[%s1 + $0x374] sm:$0xf]
  %v351 = vld [vmem:[%s1 + $0x378] sm:$0xf]
  %v352 = vld [vmem:[%s1 + $0x37c] sm:$0xf]
  %v353 = vld [vmem:[%s1 + $0x380] sm:$0xf]
  %v354 = vld [vmem:[%s1 + $0x384] sm:$0xf]
  %v355 = vld [vmem:[%s1 + $0x388] sm:$0xf]
  %v356 = vld [vmem:[%s1 + $0x38c] sm:$0xf]
  %v357 = vld [vmem:[%s1 + $0x390] sm:$0xf]
  %v358 = vld [vmem:[%s1 + $0x394] sm:$0xf]
  %v359 = vld [vmem:[%s1 + $0x398] sm:$0xf]
  %v360 = vld [vmem:[%s1 + $0x39c] sm:$0xf]
  %v361 = vld [vmem:[%s1 + $0x3a0] sm:$0xf]
  %v362 = vld [vmem:[%s1 + $0x3a4] sm:$0xf]
  %v363 = vld [vmem:[%s1 + $0x3a8] sm:$0xf]
  %v364 = vld [vmem:[%s1 + $0x3ac] sm:$0xf]
  %v365 = vld [vmem:[%s1 + $0x3b0] sm:$0xf]
  %v366 = vld [vmem:[%s1 + $0x3b4] sm:$0xf]
  %v367 = vld [vmem:[%s1 + $0x3b8] sm:$0xf]
  %v368 = vld [vmem:[%s1 + $0x3bc] sm:$0xf]
  %v369 = vld [vmem:[%s1 + $0x3c0] sm:$0xf]
  %v370 = vld [vmem:[%s1 + $0x3c4] sm:$0xf]
  %v371 = vld [vmem:[%s1 + $0x3c8] sm:$0xf]
  %v372 = vld [vmem:[%s1 + $0x3cc] sm:$0xf]
  %v373 = vld [vmem:[%s1 + $0x3d0] sm:$0xf]
  %v374 = vld [vmem:[%s1 + $0x3d4] sm:$0xf]
  %v375 = vld [vmem:[%s1 + $0x3d8] sm:$0xf]
  %v376 = vld [vmem:[%s1 + $0x3dc] sm:$0xf]
  %v377 = vld [vmem:[%s1 + $0x3e0] sm:$0xf]
  %v378 = vld [vmem:[%s1 + $0x3e4] sm:$0xf]
  %v379 = vld [vmem:[%s1 + $0x3e8] sm:$0xf]
  %v380 = vld [vmem:[%s1 + $0x3ec] sm:$0xf]
  %v381 = vld [vmem:[%s1 + $0x3f0] sm:$0xf]
  %v382 = vld [vmem:[%s1 + $0x3f4] sm:$0xf]
  %v383 = vld [vmem:[%s1 + $0x3f8] sm:$0xf]
  %v384 = vld [vmem:[%s1 + $0x3fc] sm:$0xf]
  %v385 = vld [vmem:[%s2] sm:$0x1]
  %v387 = vlaneseq
  %v388 = vshrl.u32 %v387, 7
  %v389 = vsub.s32 0, %v388
  %v390 = vrot.slane %v385, %v389
  %v504 = vunpack.c.l.b16 %v17
  %v505 = vunpack.c.h.b16 %v17
  %v506 = vunpack.c.l.b16 %v18
  %v507 = vunpack.c.h.b16 %v18
  %v508 = vunpack.c.l.b16 %v19
  %v509 = vunpack.c.h.b16 %v19
  %v510 = vunpack.c.l.b16 %v20
  %v511 = vunpack.c.h.b16 %v20
  %v512 = vunpack.c.l.b16 %v21
  %v513 = vunpack.c.h.b16 %v21
  %v514 = vunpack.c.l.b16 %v22
  %v515 = vunpack.c.h.b16 %v22
  %v516 = vunpack.c.l.b16 %v23
  %v517 = vunpack.c.h.b16 %v23
  %v518 = vunpack.c.l.b16 %v24
  %v519 = vunpack.c.h.b16 %v24
  %v520 = vunpack.c.l.b16 %v25
  %v521 = vunpack.c.h.b16 %v25
  %v522 = vunpack.c.l.b16 %v26
  %v523 = vunpack.c.h.b16 %v26
  %v524 = vunpack.c.l.b16 %v27
  %v525 = vunpack.c.h.b16 %v27
  %v526 = vunpack.c.l.b16 %v28
  %v527 = vunpack.c.h.b16 %v28
  %v528 = vunpack.c.l.b16 %v29
  %v529 = vunpack.c.h.b16 %v29
  %v530 = vunpack.c.l.b16 %v30
  %v531 = vunpack.c.h.b16 %v30
  %v532 = vunpack.c.l.b16 %v31
  %v533 = vunpack.c.h.b16 %v31
  %v534 = vunpack.c.l.b16 %v32
  %v535 = vunpack.c.h.b16 %v32
  %v536 = vunpack.c.l.b16 %v33
  %v537 = vunpack.c.h.b16 %v33
  %v538 = vunpack.c.l.b16 %v34
  %v539 = vunpack.c.h.b16 %v34
  %v540 = vunpack.c.l.b16 %v35
  %v541 = vunpack.c.h.b16 %v35
  %v542 = vunpack.c.l.b16 %v36
  %v543 = vunpack.c.h.b16 %v36
  %v544 = vunpack.c.l.b16 %v37
  %v545 = vunpack.c.h.b16 %v37
  %v546 = vunpack.c.l.b16 %v38
  %v547 = vunpack.c.h.b16 %v38
  %v548 = vunpack.c.l.b16 %v39
  %v549 = vunpack.c.h.b16 %v39
  %v550 = vunpack.c.l.b16 %v40
  %v551 = vunpack.c.h.b16 %v40
  %v552 = vunpack.c.l.b16 %v41
  %v553 = vunpack.c.h.b16 %v41
  %v554 = vunpack.c.l.b16 %v42
  %v555 = vunpack.c.h.b16 %v42
  %v556 = vunpack.c.l.b16 %v43
  %v557 = vunpack.c.h.b16 %v43
  %v558 = vunpack.c.l.b16 %v44
  %v559 = vunpack.c.h.b16 %v44
  %v560 = vunpack.c.l.b16 %v45
  %v561 = vunpack.c.h.b16 %v45
  %v562 = vunpack.c.l.b16 %v46
  %v563 = vunpack.c.h.b16 %v46
  %v564 = vunpack.c.l.b16 %v47
  %v565 = vunpack.c.h.b16 %v47
  %v566 = vunpack.c.l.b16 %v48
  %v567 = vunpack.c.h.b16 %v48
  %v568 = vunpack.c.l.b16 %v49
  %v569 = vunpack.c.h.b16 %v49
  %v570 = vunpack.c.l.b16 %v50
  %v571 = vunpack.c.h.b16 %v50
  %v572 = vunpack.c.l.b16 %v51
  %v573 = vunpack.c.h.b16 %v51
  %v574 = vunpack.c.l.b16 %v52
  %v575 = vunpack.c.h.b16 %v52
  %v576 = vunpack.c.l.b16 %v53
  %v577 = vunpack.c.h.b16 %v53
  %v578 = vunpack.c.l.b16 %v54
  %v579 = vunpack.c.h.b16 %v54
  %v580 = vunpack.c.l.b16 %v55
  %v581 = vunpack.c.h.b16 %v55
  %v582 = vunpack.c.l.b16 %v56
  %v583 = vunpack.c.h.b16 %v56
  %v584 = vunpack.c.l.b16 %v57
  %v585 = vunpack.c.h.b16 %v57
  %v586 = vunpack.c.l.b16 %v58
  %v587 = vunpack.c.h.b16 %v58
  %v588 = vunpack.c.l.b16 %v59
  %v589 = vunpack.c.h.b16 %v59
  %v590 = vunpack.c.l.b16 %v60
  %v591 = vunpack.c.h.b16 %v60
  %v592 = vunpack.c.l.b16 %v61
  %v593 = vunpack.c.h.b16 %v61
  %v594 = vunpack.c.l.b16 %v62
  %v595 = vunpack.c.h.b16 %v62
  %v596 = vunpack.c.l.b16 %v63
  %v597 = vunpack.c.h.b16 %v63
  %v598 = vunpack.c.l.b16 %v64
  %v599 = vunpack.c.h.b16 %v64
  %v600 = vunpack.c.l.b16 %v65
  %v601 = vunpack.c.h.b16 %v65
  %v602 = vunpack.c.l.b16 %v66
  %v603 = vunpack.c.h.b16 %v66
  %v604 = vunpack.c.l.b16 %v67
  %v605 = vunpack.c.h.b16 %v67
  %v606 = vunpack.c.l.b16 %v68
  %v607 = vunpack.c.h.b16 %v68
  %v608 = vunpack.c.l.b16 %v69
  %v609 = vunpack.c.h.b16 %v69
  %v610 = vunpack.c.l.b16 %v70
  %v611 = vunpack.c.h.b16 %v70
  %v612 = vunpack.c.l.b16 %v71
  %v613 = vunpack.c.h.b16 %v71
  %v614 = vunpack.c.l.b16 %v72
  %v615 = vunpack.c.h.b16 %v72
  %v616 = vunpack.c.l.b16 %v73
  %v617 = vunpack.c.h.b16 %v73
  %v618 = vunpack.c.l.b16 %v74
  %v619 = vunpack.c.h.b16 %v74
  %v620 = vunpack.c.l.b16 %v75
  %v621 = vunpack.c.h.b16 %v75
  %v622 = vunpack.c.l.b16 %v76
  %v623 = vunpack.c.h.b16 %v76
  %v624 = vunpack.c.l.b16 %v77
  %v625 = vunpack.c.h.b16 %v77
  %v626 = vunpack.c.l.b16 %v78
  %v627 = vunpack.c.h.b16 %v78
  %v628 = vunpack.c.l.b16 %v79
  %v629 = vunpack.c.h.b16 %v79
  %v630 = vunpack.c.l.b16 %v80
  %v631 = vunpack.c.h.b16 %v80
  %v632 = vunpack.c.l.b16 %v81
  %v633 = vunpack.c.h.b16 %v81
  %v634 = vunpack.c.l.b16 %v82
  %v635 = vunpack.c.h.b16 %v82
  %v636 = vunpack.c.l.b16 %v83
  %v637 = vunpack.c.h.b16 %v83
  %v638 = vunpack.c.l.b16 %v84
  %v639 = vunpack.c.h.b16 %v84
  %v640 = vunpack.c.l.b16 %v85
  %v641 = vunpack.c.h.b16 %v85
  %v642 = vunpack.c.l.b16 %v86
  %v643 = vunpack.c.h.b16 %v86
  %v644 = vunpack.c.l.b16 %v87
  %v645 = vunpack.c.h.b16 %v87
  %v646 = vunpack.c.l.b16 %v88
  %v647 = vunpack.c.h.b16 %v88
  %v648 = vunpack.c.l.b16 %v89
  %v649 = vunpack.c.h.b16 %v89
  %v650 = vunpack.c.l.b16 %v90
  %v651 = vunpack.c.h.b16 %v90
  %v652 = vunpack.c.l.b16 %v91
  %v653 = vunpack.c.h.b16 %v91
  %v654 = vunpack.c.l.b16 %v92
  %v655 = vunpack.c.h.b16 %v92
  %v656 = vunpack.c.l.b16 %v93
  %v657 = vunpack.c.h.b16 %v93
  %v658 = vunpack.c.l.b16 %v94
  %v659 = vunpack.c.h.b16 %v94
  %v660 = vunpack.c.l.b16 %v95
  %v661 = vunpack.c.h.b16 %v95
  %v662 = vunpack.c.l.b16 %v96
  %v663 = vunpack.c.h.b16 %v96
  %v664 = vunpack.c.l.b16 %v97
  %v665 = vunpack.c.h.b16 %v97
  %v666 = vunpack.c.l.b16 %v98
  %v667 = vunpack.c.h.b16 %v98
  %v668 = vunpack.c.l.b16 %v99
  %v669 = vunpack.c.h.b16 %v99
  %v670 = vunpack.c.l.b16 %v100
  %v671 = vunpack.c.h.b16 %v100
  %v672 = vunpack.c.l.b16 %v101
  %v673 = vunpack.c.h.b16 %v101
  %v674 = vunpack.c.l.b16 %v102
  %v675 = vunpack.c.h.b16 %v102
  %v676 = vunpack.c.l.b16 %v103
  %v677 = vunpack.c.h.b16 %v103
  %v678 = vunpack.c.l.b16 %v104
  %v679 = vunpack.c.h.b16 %v104
  %v680 = vunpack.c.l.b16 %v105
  %v681 = vunpack.c.h.b16 %v105
  %v682 = vunpack.c.l.b16 %v106
  %v683 = vunpack.c.h.b16 %v106
  %v684 = vunpack.c.l.b16 %v107
  %v685 = vunpack.c.h.b16 %v107
  %v686 = vunpack.c.l.b16 %v108
  %v687 = vunpack.c.h.b16 %v108
  %v688 = vunpack.c.l.b16 %v109
  %v689 = vunpack.c.h.b16 %v109
  %v690 = vunpack.c.l.b16 %v110
  %v691 = vunpack.c.h.b16 %v110
  %v692 = vunpack.c.l.b16 %v111
  %v693 = vunpack.c.h.b16 %v111
  %v694 = vunpack.c.l.b16 %v112
  %v695 = vunpack.c.h.b16 %v112
  %v696 = vunpack.c.l.b16 %v113
  %v697 = vunpack.c.h.b16 %v113
  %v698 = vunpack.c.l.b16 %v114
  %v699 = vunpack.c.h.b16 %v114
  %v700 = vunpack.c.l.b16 %v115
  %v701 = vunpack.c.h.b16 %v115
  %v702 = vunpack.c.l.b16 %v116
  %v703 = vunpack.c.h.b16 %v116
  %v704 = vunpack.c.l.b16 %v117
  %v705 = vunpack.c.h.b16 %v117
  %v706 = vunpack.c.l.b16 %v118
  %v707 = vunpack.c.h.b16 %v118
  %v708 = vunpack.c.l.b16 %v119
  %v709 = vunpack.c.h.b16 %v119
  %v710 = vunpack.c.l.b16 %v120
  %v711 = vunpack.c.h.b16 %v120
  %v712 = vunpack.c.l.b16 %v121
  %v713 = vunpack.c.h.b16 %v121
  %v714 = vunpack.c.l.b16 %v122
  %v715 = vunpack.c.h.b16 %v122
  %v716 = vunpack.c.l.b16 %v123
  %v717 = vunpack.c.h.b16 %v123
  %v718 = vunpack.c.l.b16 %v124
  %v719 = vunpack.c.h.b16 %v124
  %v720 = vunpack.c.l.b16 %v125
  %v721 = vunpack.c.h.b16 %v125
  %v722 = vunpack.c.l.b16 %v126
  %v723 = vunpack.c.h.b16 %v126
  %v724 = vunpack.c.l.b16 %v127
  %v725 = vunpack.c.h.b16 %v127
  %v726 = vunpack.c.l.b16 %v128
  %v727 = vunpack.c.h.b16 %v128
  %v728 = vpack.c.b16 %v520, %v504
  %v729 = vpack.c.b16 %v521, %v505
  %v730 = vpack.c.b16 %v522, %v506
  %v731 = vpack.c.b16 %v523, %v507
  %v732 = vpack.c.b16 %v524, %v508
  %v733 = vpack.c.b16 %v525, %v509
  %v734 = vpack.c.b16 %v526, %v510
  %v735 = vpack.c.b16 %v527, %v511
  %v736 = vpack.c.b16 %v528, %v512
  %v737 = vpack.c.b16 %v529, %v513
  %v738 = vpack.c.b16 %v530, %v514
  %v739 = vpack.c.b16 %v531, %v515
  %v740 = vpack.c.b16 %v532, %v516
  %v741 = vpack.c.b16 %v533, %v517
  %v742 = vpack.c.b16 %v534, %v518
  %v743 = vpack.c.b16 %v535, %v519
  %v744 = vpack.c.b16 %v552, %v536
  %v745 = vpack.c.b16 %v553, %v537
  %v746 = vpack.c.b16 %v554, %v538
  %v747 = vpack.c.b16 %v555, %v539
  %v748 = vpack.c.b16 %v556, %v540
  %v749 = vpack.c.b16 %v557, %v541
  %v750 = vpack.c.b16 %v558, %v542
  %v751 = vpack.c.b16 %v559, %v543
  %v752 = vpack.c.b16 %v560, %v544
  %v753 = vpack.c.b16 %v561, %v545
  %v754 = vpack.c.b16 %v562, %v546
  %v755 = vpack.c.b16 %v563, %v547
  %v756 = vpack.c.b16 %v564, %v548
  %v757 = vpack.c.b16 %v565, %v549
  %v758 = vpack.c.b16 %v566, %v550
  %v759 = vpack.c.b16 %v567, %v551
  %v760 = vpack.c.b16 %v584, %v568
  %v761 = vpack.c.b16 %v585, %v569
  %v762 = vpack.c.b16 %v586, %v570
  %v763 = vpack.c.b16 %v587, %v571
  %v764 = vpack.c.b16 %v588, %v572
  %v765 = vpack.c.b16 %v589, %v573
  %v766 = vpack.c.b16 %v590, %v574
  %v767 = vpack.c.b16 %v591, %v575
  %v768 = vpack.c.b16 %v592, %v576
  %v769 = vpack.c.b16 %v593, %v577
  %v770 = vpack.c.b16 %v594, %v578
  %v771 = vpack.c.b16 %v595, %v579
  %v772 = vpack.c.b16 %v596, %v580
  %v773 = vpack.c.b16 %v597, %v581
  %v774 = vpack.c.b16 %v598, %v582
  %v775 = vpack.c.b16 %v599, %v583
  %v776 = vpack.c.b16 %v616, %v600
  %v777 = vpack.c.b16 %v617, %v601
  %v778 = vpack.c.b16 %v618, %v602
  %v779 = vpack.c.b16 %v619, %v603
  %v780 = vpack.c.b16 %v620, %v604
  %v781 = vpack.c.b16 %v621, %v605
  %v782 = vpack.c.b16 %v622, %v606
  %v783 = vpack.c.b16 %v623, %v607
  %v784 = vpack.c.b16 %v624, %v608
  %v785 = vpack.c.b16 %v625, %v609
  %v786 = vpack.c.b16 %v626, %v610
  %v787 = vpack.c.b16 %v627, %v611
  %v788 = vpack.c.b16 %v628, %v612
  %v789 = vpack.c.b16 %v629, %v613
  %v790 = vpack.c.b16 %v630, %v614
  %v791 = vpack.c.b16 %v631, %v615
  %v792 = vpack.c.b16 %v648, %v632
  %v793 = vpack.c.b16 %v649, %v633
  %v794 = vpack.c.b16 %v650, %v634
  %v795 = vpack.c.b16 %v651, %v635
  %v796 = vpack.c.b16 %v652, %v636
  %v797 = vpack.c.b16 %v653, %v637
  %v798 = vpack.c.b16 %v654, %v638
  %v799 = vpack.c.b16 %v655, %v639
  %v800 = vpack.c.b16 %v656, %v640
  %v801 = vpack.c.b16 %v657, %v641
  %v802 = vpack.c.b16 %v658, %v642
  %v803 = vpack.c.b16 %v659, %v643
  %v804 = vpack.c.b16 %v660, %v644
  %v805 = vpack.c.b16 %v661, %v645
  %v806 = vpack.c.b16 %v662, %v646
  %v807 = vpack.c.b16 %v663, %v647
  %v808 = vpack.c.b16 %v680, %v664
  %v809 = vpack.c.b16 %v681, %v665
  %v810 = vpack.c.b16 %v682, %v666
  %v811 = vpack.c.b16 %v683, %v667
  %v812 = vpack.c.b16 %v684, %v668
  %v813 = vpack.c.b16 %v685, %v669
  %v814 = vpack.c.b16 %v686, %v670
  %v815 = vpack.c.b16 %v687, %v671
  %v816 = vpack.c.b16 %v688, %v672
  %v817 = vpack.c.b16 %v689, %v673
  %v818 = vpack.c.b16 %v690, %v674
  %v819 = vpack.c.b16 %v691, %v675
  %v820 = vpack.c.b16 %v692, %v676
  %v821 = vpack.c.b16 %v693, %v677
  %v822 = vpack.c.b16 %v694, %v678
  %v823 = vpack.c.b16 %v695, %v679
  %v824 = vpack.c.b16 %v712, %v696
  %v825 = vpack.c.b16 %v713, %v697
  %v826 = vpack.c.b16 %v714, %v698
  %v827 = vpack.c.b16 %v715, %v699
  %v828 = vpack.c.b16 %v716, %v700
  %v829 = vpack.c.b16 %v717, %v701
  %v830 = vpack.c.b16 %v718, %v702
  %v831 = vpack.c.b16 %v719, %v703
  %v832 = vpack.c.b16 %v720, %v704
  %v833 = vpack.c.b16 %v721, %v705
  %v834 = vpack.c.b16 %v722, %v706
  %v835 = vpack.c.b16 %v723, %v707
  %v836 = vpack.c.b16 %v724, %v708
  %v837 = vpack.c.b16 %v725, %v709
  %v838 = vpack.c.b16 %v726, %v710
  %v839 = vpack.c.b16 %v727, %v711
  %v1208 = vunpack.c.l.b16 %v129
  %v1209 = vunpack.c.l.b16 %v130
  %v1210 = vunpack.c.l.b16 %v131
  %v1211 = vunpack.c.l.b16 %v132
  %v1212 = vunpack.c.l.b16 %v133
  %v1213 = vunpack.c.l.b16 %v134
  %v1214 = vunpack.c.l.b16 %v135
  %v1215 = vunpack.c.l.b16 %v136
  %v1216 = vunpack.c.l.b16 %v137
  %v1217 = vunpack.c.l.b16 %v138
  %v1218 = vunpack.c.l.b16 %v139
  %v1219 = vunpack.c.l.b16 %v140
  %v1220 = vunpack.c.l.b16 %v141
  %v1221 = vunpack.c.l.b16 %v142
  %v1222 = vunpack.c.l.b16 %v143
  %v1223 = vunpack.c.l.b16 %v144
  %v1224 = vunpack.c.l.b16 %v145
  %v1225 = vunpack.c.l.b16 %v146
  %v1226 = vunpack.c.l.b16 %v147
  %v1227 = vunpack.c.l.b16 %v148
  %v1228 = vunpack.c.l.b16 %v149
  %v1229 = vunpack.c.l.b16 %v150
  %v1230 = vunpack.c.l.b16 %v151
  %v1231 = vunpack.c.l.b16 %v152
  %v1232 = vunpack.c.l.b16 %v153
  %v1233 = vunpack.c.l.b16 %v154
  %v1234 = vunpack.c.l.b16 %v155
  %v1235 = vunpack.c.l.b16 %v156
  %v1236 = vunpack.c.l.b16 %v157
  %v1237 = vunpack.c.l.b16 %v158
  %v1238 = vunpack.c.l.b16 %v159
  %v1239 = vunpack.c.l.b16 %v160
  %v1240 = vunpack.c.l.b16 %v161
  %v1241 = vunpack.c.l.b16 %v162
  %v1242 = vunpack.c.l.b16 %v163
  %v1243 = vunpack.c.l.b16 %v164
  %v1244 = vunpack.c.l.b16 %v165
  %v1245 = vunpack.c.l.b16 %v166
  %v1246 = vunpack.c.l.b16 %v167
  %v1247 = vunpack.c.l.b16 %v168
  %v1248 = vunpack.c.l.b16 %v169
  %v1249 = vunpack.c.l.b16 %v170
  %v1250 = vunpack.c.l.b16 %v171
  %v1251 = vunpack.c.l.b16 %v172
  %v1252 = vunpack.c.l.b16 %v173
  %v1253 = vunpack.c.l.b16 %v174
  %v1254 = vunpack.c.l.b16 %v175
  %v1255 = vunpack.c.l.b16 %v176
  %v1256 = vunpack.c.l.b16 %v177
  %v1257 = vunpack.c.l.b16 %v178
  %v1258 = vunpack.c.l.b16 %v179
  %v1259 = vunpack.c.l.b16 %v180
  %v1260 = vunpack.c.l.b16 %v181
  %v1261 = vunpack.c.l.b16 %v182
  %v1262 = vunpack.c.l.b16 %v183
  %v1263 = vunpack.c.l.b16 %v184
  %v1264 = vunpack.c.l.b16 %v185
  %v1265 = vunpack.c.l.b16 %v186
  %v1266 = vunpack.c.l.b16 %v187
  %v1267 = vunpack.c.l.b16 %v188
  %v1268 = vunpack.c.l.b16 %v189
  %v1269 = vunpack.c.l.b16 %v190
  %v1270 = vunpack.c.l.b16 %v191
  %v1271 = vunpack.c.l.b16 %v192
  %v1272 = vunpack.c.l.b16 %v193
  %v1273 = vunpack.c.l.b16 %v194
  %v1274 = vunpack.c.l.b16 %v195
  %v1275 = vunpack.c.l.b16 %v196
  %v1276 = vunpack.c.l.b16 %v197
  %v1277 = vunpack.c.l.b16 %v198
  %v1278 = vunpack.c.l.b16 %v199
  %v1279 = vunpack.c.l.b16 %v200
  %v1280 = vunpack.c.l.b16 %v201
  %v1281 = vunpack.c.l.b16 %v202
  %v1282 = vunpack.c.l.b16 %v203
  %v1283 = vunpack.c.l.b16 %v204
  %v1284 = vunpack.c.l.b16 %v205
  %v1285 = vunpack.c.l.b16 %v206
  %v1286 = vunpack.c.l.b16 %v207
  %v1287 = vunpack.c.l.b16 %v208
  %v1288 = vunpack.c.l.b16 %v209
  %v1289 = vunpack.c.l.b16 %v210
  %v1290 = vunpack.c.l.b16 %v211
  %v1291 = vunpack.c.l.b16 %v212
  %v1292 = vunpack.c.l.b16 %v213
  %v1293 = vunpack.c.l.b16 %v214
  %v1294 = vunpack.c.l.b16 %v215
  %v1295 = vunpack.c.l.b16 %v216
  %v1296 = vunpack.c.l.b16 %v217
  %v1297 = vunpack.c.l.b16 %v218
  %v1298 = vunpack.c.l.b16 %v219
  %v1299 = vunpack.c.l.b16 %v220
  %v1300 = vunpack.c.l.b16 %v221
  %v1301 = vunpack.c.l.b16 %v222
  %v1302 = vunpack.c.l.b16 %v223
  %v1303 = vunpack.c.l.b16 %v224
  %v1304 = vunpack.c.l.b16 %v225
  %v1305 = vunpack.c.l.b16 %v226
  %v1306 = vunpack.c.l.b16 %v227
  %v1307 = vunpack.c.l.b16 %v228
  %v1308 = vunpack.c.l.b16 %v229
  %v1309 = vunpack.c.l.b16 %v230
  %v1310 = vunpack.c.l.b16 %v231
  %v1311 = vunpack.c.l.b16 %v232
  %v1312 = vunpack.c.l.b16 %v233
  %v1313 = vunpack.c.l.b16 %v234
  %v1314 = vunpack.c.l.b16 %v235
  %v1315 = vunpack.c.l.b16 %v236
  %v1316 = vunpack.c.l.b16 %v237
  %v1317 = vunpack.c.l.b16 %v238
  %v1318 = vunpack.c.l.b16 %v239
  %v1319 = vunpack.c.l.b16 %v240
  %v1320 = vunpack.c.l.b16 %v241
  %v1321 = vunpack.c.l.b16 %v242
  %v1322 = vunpack.c.l.b16 %v243
  %v1323 = vunpack.c.l.b16 %v244
  %v1324 = vunpack.c.l.b16 %v245
  %v1325 = vunpack.c.l.b16 %v246
  %v1326 = vunpack.c.l.b16 %v247
  %v1327 = vunpack.c.l.b16 %v248
  %v1328 = vunpack.c.l.b16 %v249
  %v1329 = vunpack.c.l.b16 %v250
  %v1330 = vunpack.c.l.b16 %v251
  %v1331 = vunpack.c.l.b16 %v252
  %v1332 = vunpack.c.l.b16 %v253
  %v1333 = vunpack.c.l.b16 %v254
  %v1334 = vunpack.c.l.b16 %v255
  %v1335 = vunpack.c.l.b16 %v256
  %v1336 = vunpack.c.l.b16 %v257
  %v1337 = vunpack.c.l.b16 %v258
  %v1338 = vunpack.c.l.b16 %v259
  %v1339 = vunpack.c.l.b16 %v260
  %v1340 = vunpack.c.l.b16 %v261
  %v1341 = vunpack.c.l.b16 %v262
  %v1342 = vunpack.c.l.b16 %v263
  %v1343 = vunpack.c.l.b16 %v264
  %v1344 = vunpack.c.l.b16 %v265
  %v1345 = vunpack.c.l.b16 %v266
  %v1346 = vunpack.c.l.b16 %v267
  %v1347 = vunpack.c.l.b16 %v268
  %v1348 = vunpack.c.l.b16 %v269
  %v1349 = vunpack.c.l.b16 %v270
  %v1350 = vunpack.c.l.b16 %v271
  %v1351 = vunpack.c.l.b16 %v272
  %v1352 = vunpack.c.l.b16 %v273
  %v1353 = vunpack.c.l.b16 %v274
  %v1354 = vunpack.c.l.b16 %v275
  %v1355 = vunpack.c.l.b16 %v276
  %v1356 = vunpack.c.l.b16 %v277
  %v1357 = vunpack.c.l.b16 %v278
  %v1358 = vunpack.c.l.b16 %v279
  %v1359 = vunpack.c.l.b16 %v280
  %v1360 = vunpack.c.l.b16 %v281
  %v1361 = vunpack.c.l.b16 %v282
  %v1362 = vunpack.c.l.b16 %v283
  %v1363 = vunpack.c.l.b16 %v284
  %v1364 = vunpack.c.l.b16 %v285
  %v1365 = vunpack.c.l.b16 %v286
  %v1366 = vunpack.c.l.b16 %v287
  %v1367 = vunpack.c.l.b16 %v288
  %v1368 = vunpack.c.l.b16 %v289
  %v1369 = vunpack.c.l.b16 %v290
  %v1370 = vunpack.c.l.b16 %v291
  %v1371 = vunpack.c.l.b16 %v292
  %v1372 = vunpack.c.l.b16 %v293
  %v1373 = vunpack.c.l.b16 %v294
  %v1374 = vunpack.c.l.b16 %v295
  %v1375 = vunpack.c.l.b16 %v296
  %v1376 = vunpack.c.l.b16 %v297
  %v1377 = vunpack.c.l.b16 %v298
  %v1378 = vunpack.c.l.b16 %v299
  %v1379 = vunpack.c.l.b16 %v300
  %v1380 = vunpack.c.l.b16 %v301
  %v1381 = vunpack.c.l.b16 %v302
  %v1382 = vunpack.c.l.b16 %v303
  %v1383 = vunpack.c.l.b16 %v304
  %v1384 = vunpack.c.l.b16 %v305
  %v1385 = vunpack.c.l.b16 %v306
  %v1386 = vunpack.c.l.b16 %v307
  %v1387 = vunpack.c.l.b16 %v308
  %v1388 = vunpack.c.l.b16 %v309
  %v1389 = vunpack.c.l.b16 %v310
  %v1390 = vunpack.c.l.b16 %v311
  %v1391 = vunpack.c.l.b16 %v312
  %v1392 = vunpack.c.l.b16 %v313
  %v1393 = vunpack.c.l.b16 %v314
  %v1394 = vunpack.c.l.b16 %v315
  %v1395 = vunpack.c.l.b16 %v316
  %v1396 = vunpack.c.l.b16 %v317
  %v1397 = vunpack.c.l.b16 %v318
  %v1398 = vunpack.c.l.b16 %v319
  %v1399 = vunpack.c.l.b16 %v320
  %v1400 = vunpack.c.l.b16 %v321
  %v1401 = vunpack.c.l.b16 %v322
  %v1402 = vunpack.c.l.b16 %v323
  %v1403 = vunpack.c.l.b16 %v324
  %v1404 = vunpack.c.l.b16 %v325
  %v1405 = vunpack.c.l.b16 %v326
  %v1406 = vunpack.c.l.b16 %v327
  %v1407 = vunpack.c.l.b16 %v328
  %v1408 = vunpack.c.l.b16 %v329
  %v1409 = vunpack.c.l.b16 %v330
  %v1410 = vunpack.c.l.b16 %v331
  %v1411 = vunpack.c.l.b16 %v332
  %v1412 = vunpack.c.l.b16 %v333
  %v1413 = vunpack.c.l.b16 %v334
  %v1414 = vunpack.c.l.b16 %v335
  %v1415 = vunpack.c.l.b16 %v336
  %v1416 = vunpack.c.l.b16 %v337
  %v1417 = vunpack.c.l.b16 %v338
  %v1418 = vunpack.c.l.b16 %v339
  %v1419 = vunpack.c.l.b16 %v340
  %v1420 = vunpack.c.l.b16 %v341
  %v1421 = vunpack.c.l.b16 %v342
  %v1422 = vunpack.c.l.b16 %v343
  %v1423 = vunpack.c.l.b16 %v344
  %v1424 = vunpack.c.l.b16 %v345
  %v1425 = vunpack.c.l.b16 %v346
  %v1426 = vunpack.c.l.b16 %v347
  %v1427 = vunpack.c.l.b16 %v348
  %v1428 = vunpack.c.l.b16 %v349
  %v1429 = vunpack.c.l.b16 %v350
  %v1430 = vunpack.c.l.b16 %v351
  %v1431 = vunpack.c.l.b16 %v352
  %v1432 = vunpack.c.l.b16 %v353
  %v1433 = vunpack.c.l.b16 %v354
  %v1434 = vunpack.c.l.b16 %v355
  %v1435 = vunpack.c.l.b16 %v356
  %v1436 = vunpack.c.l.b16 %v357
  %v1437 = vunpack.c.l.b16 %v358
  %v1438 = vunpack.c.l.b16 %v359
  %v1439 = vunpack.c.l.b16 %v360
  %v1440 = vunpack.c.l.b16 %v361
  %v1441 = vunpack.c.l.b16 %v362
  %v1442 = vunpack.c.l.b16 %v363
  %v1443 = vunpack.c.l.b16 %v364
  %v1444 = vunpack.c.l.b16 %v365
  %v1445 = vunpack.c.l.b16 %v366
  %v1446 = vunpack.c.l.b16 %v367
  %v1447 = vunpack.c.l.b16 %v368
  %v1448 = vunpack.c.l.b16 %v369
  %v1449 = vunpack.c.l.b16 %v370
  %v1450 = vunpack.c.l.b16 %v371
  %v1451 = vunpack.c.l.b16 %v372
  %v1452 = vunpack.c.l.b16 %v373
  %v1453 = vunpack.c.l.b16 %v374
  %v1454 = vunpack.c.l.b16 %v375
  %v1455 = vunpack.c.l.b16 %v376
  %v1456 = vunpack.c.l.b16 %v377
  %v1457 = vunpack.c.l.b16 %v378
  %v1458 = vunpack.c.l.b16 %v379
  %v1459 = vunpack.c.l.b16 %v380
  %v1460 = vunpack.c.l.b16 %v381
  %v1461 = vunpack.c.l.b16 %v382
  %v1462 = vunpack.c.l.b16 %v383
  %v1463 = vunpack.c.l.b16 %v384
  %v1464 = vpack.c.b16 %v1209, %v1208
  %v1465 = vpack.c.b16 %v1211, %v1210
  %v1466 = vpack.c.b16 %v1213, %v1212
  %v1467 = vpack.c.b16 %v1215, %v1214
  %v1468 = vpack.c.b16 %v1217, %v1216
  %v1469 = vpack.c.b16 %v1219, %v1218
  %v1470 = vpack.c.b16 %v1221, %v1220
  %v1471 = vpack.c.b16 %v1223, %v1222
  %v1472 = vpack.c.b16 %v1225, %v1224
  %v1473 = vpack.c.b16 %v1227, %v1226
  %v1474 = vpack.c.b16 %v1229, %v1228
  %v1475 = vpack.c.b16 %v1231, %v1230
  %v1476 = vpack.c.b16 %v1233, %v1232
  %v1477 = vpack.c.b16 %v1235, %v1234
  %v1478 = vpack.c.b16 %v1237, %v1236
  %v1479 = vpack.c.b16 %v1239, %v1238
  %v1480 = vpack.c.b16 %v1241, %v1240
  %v1481 = vpack.c.b16 %v1243, %v1242
  %v1482 = vpack.c.b16 %v1245, %v1244
  %v1483 = vpack.c.b16 %v1247, %v1246
  %v1484 = vpack.c.b16 %v1249, %v1248
  %v1485 = vpack.c.b16 %v1251, %v1250
  %v1486 = vpack.c.b16 %v1253, %v1252
  %v1487 = vpack.c.b16 %v1255, %v1254
  %v1488 = vpack.c.b16 %v1257, %v1256
  %v1489 = vpack.c.b16 %v1259, %v1258
  %v1490 = vpack.c.b16 %v1261, %v1260
  %v1491 = vpack.c.b16 %v1263, %v1262
  %v1492 = vpack.c.b16 %v1265, %v1264
  %v1493 = vpack.c.b16 %v1267, %v1266
  %v1494 = vpack.c.b16 %v1269, %v1268
  %v1495 = vpack.c.b16 %v1271, %v1270
  %v1496 = vpack.c.b16 %v1273, %v1272
  %v1497 = vpack.c.b16 %v1275, %v1274
  %v1498 = vpack.c.b16 %v1277, %v1276
  %v1499 = vpack.c.b16 %v1279, %v1278
  %v1500 = vpack.c.b16 %v1281, %v1280
  %v1501 = vpack.c.b16 %v1283, %v1282
  %v1502 = vpack.c.b16 %v1285, %v1284
  %v1503 = vpack.c.b16 %v1287, %v1286
  %v1504 = vpack.c.b16 %v1289, %v1288
  %v1505 = vpack.c.b16 %v1291, %v1290
  %v1506 = vpack.c.b16 %v1293, %v1292
  %v1507 = vpack.c.b16 %v1295, %v1294
  %v1508 = vpack.c.b16 %v1297, %v1296
  %v1509 = vpack.c.b16 %v1299, %v1298
  %v1510 = vpack.c.b16 %v1301, %v1300
  %v1511 = vpack.c.b16 %v1303, %v1302
  %v1512 = vpack.c.b16 %v1305, %v1304
  %v1513 = vpack.c.b16 %v1307, %v1306
  %v1514 = vpack.c.b16 %v1309, %v1308
  %v1515 = vpack.c.b16 %v1311, %v1310
  %v1516 = vpack.c.b16 %v1313, %v1312
  %v1517 = vpack.c.b16 %v1315, %v1314
  %v1518 = vpack.c.b16 %v1317, %v1316
  %v1519 = vpack.c.b16 %v1319, %v1318
  %v1520 = vpack.c.b16 %v1321, %v1320
  %v1521 = vpack.c.b16 %v1323, %v1322
  %v1522 = vpack.c.b16 %v1325, %v1324
  %v1523 = vpack.c.b16 %v1327, %v1326
  %v1524 = vpack.c.b16 %v1329, %v1328
  %v1525 = vpack.c.b16 %v1331, %v1330
  %v1526 = vpack.c.b16 %v1333, %v1332
  %v1527 = vpack.c.b16 %v1335, %v1334
  %v1528 = vpack.c.b16 %v1337, %v1336
  %v1529 = vpack.c.b16 %v1339, %v1338
  %v1530 = vpack.c.b16 %v1341, %v1340
  %v1531 = vpack.c.b16 %v1343, %v1342
  %v1532 = vpack.c.b16 %v1345, %v1344
  %v1533 = vpack.c.b16 %v1347, %v1346
  %v1534 = vpack.c.b16 %v1349, %v1348
  %v1535 = vpack.c.b16 %v1351, %v1350
  %v1536 = vpack.c.b16 %v1353, %v1352
  %v1537 = vpack.c.b16 %v1355, %v1354
  %v1538 = vpack.c.b16 %v1357, %v1356
  %v1539 = vpack.c.b16 %v1359, %v1358
  %v1540 = vpack.c.b16 %v1361, %v1360
  %v1541 = vpack.c.b16 %v1363, %v1362
  %v1542 = vpack.c.b16 %v1365, %v1364
  %v1543 = vpack.c.b16 %v1367, %v1366
  %v1544 = vpack.c.b16 %v1369, %v1368
  %v1545 = vpack.c.b16 %v1371, %v1370
  %v1546 = vpack.c.b16 %v1373, %v1372
  %v1547 = vpack.c.b16 %v1375, %v1374
  %v1548 = vpack.c.b16 %v1377, %v1376
  %v1549 = vpack.c.b16 %v1379, %v1378
  %v1550 = vpack.c.b16 %v1381, %v1380
  %v1551 = vpack.c.b16 %v1383, %v1382
  %v1552 = vpack.c.b16 %v1385, %v1384
  %v1553 = vpack.c.b16 %v1387, %v1386
  %v1554 = vpack.c.b16 %v1389, %v1388
  %v1555 = vpack.c.b16 %v1391, %v1390
  %v1556 = vpack.c.b16 %v1393, %v1392
  %v1557 = vpack.c.b16 %v1395, %v1394
  %v1558 = vpack.c.b16 %v1397, %v1396
  %v1559 = vpack.c.b16 %v1399, %v1398
  %v1560 = vpack.c.b16 %v1401, %v1400
  %v1561 = vpack.c.b16 %v1403, %v1402
  %v1562 = vpack.c.b16 %v1405, %v1404
  %v1563 = vpack.c.b16 %v1407, %v1406
  %v1564 = vpack.c.b16 %v1409, %v1408
  %v1565 = vpack.c.b16 %v1411, %v1410
  %v1566 = vpack.c.b16 %v1413, %v1412
  %v1567 = vpack.c.b16 %v1415, %v1414
  %v1568 = vpack.c.b16 %v1417, %v1416
  %v1569 = vpack.c.b16 %v1419, %v1418
  %v1570 = vpack.c.b16 %v1421, %v1420
  %v1571 = vpack.c.b16 %v1423, %v1422
  %v1572 = vpack.c.b16 %v1425, %v1424
  %v1573 = vpack.c.b16 %v1427, %v1426
  %v1574 = vpack.c.b16 %v1429, %v1428
  %v1575 = vpack.c.b16 %v1431, %v1430
  %v1576 = vpack.c.b16 %v1433, %v1432
  %v1577 = vpack.c.b16 %v1435, %v1434
  %v1578 = vpack.c.b16 %v1437, %v1436
  %v1579 = vpack.c.b16 %v1439, %v1438
  %v1580 = vpack.c.b16 %v1441, %v1440
  %v1581 = vpack.c.b16 %v1443, %v1442
  %v1582 = vpack.c.b16 %v1445, %v1444
  %v1583 = vpack.c.b16 %v1447, %v1446
  %v1584 = vpack.c.b16 %v1449, %v1448
  %v1585 = vpack.c.b16 %v1451, %v1450
  %v1586 = vpack.c.b16 %v1453, %v1452
  %v1587 = vpack.c.b16 %v1455, %v1454
  %v1588 = vpack.c.b16 %v1457, %v1456
  %v1589 = vpack.c.b16 %v1459, %v1458
  %v1590 = vpack.c.b16 %v1461, %v1460
  %v1591 = vpack.c.b16 %v1463, %v1462
  %1720 = vmatprep.subr.bf16.mxu0 0
  %1721 = vmatpush1.bf16.msra.mxu0 %v1471
  %1722 = vmatprep.subr.bf16.mxu0 0
  %1723 = vmatpush1.bf16.msra.mxu0 %v1470
  %1724 = vmatprep.subr.bf16.mxu0 0
  %1725 = vmatpush1.bf16.msra.mxu0 %v1469
  %1726 = vmatprep.subr.bf16.mxu0 0
  %1727 = vmatpush1.bf16.msra.mxu0 %v1468
  %1728 = vmatprep.subr.bf16.mxu0 0
  %1729 = vmatpush1.bf16.msra.mxu0 %v1467
  %1730 = vmatprep.subr.bf16.mxu0 0
  %1731 = vmatpush1.bf16.msra.mxu0 %v1466
  %1732 = vmatprep.subr.bf16.mxu0 0
  %1733 = vmatpush1.bf16.msra.mxu0 %v1465
  %1734 = vmatprep.subr.bf16.mxu0 0
  %1735 = vmatpush1.bf16.msra.mxu0 %v1464
  %1736 = vmatprep.subr.bf16.mxu0 0
  %1737 = vmatpush2.bf16.msra.mxu0 %v1479
  %1738 = vmatprep.subr.bf16.mxu0 0
  %1739 = vmatpush2.bf16.msra.mxu0 %v1478
  %1740 = vmatprep.subr.bf16.mxu0 0
  %1741 = vmatpush2.bf16.msra.mxu0 %v1477
  %1742 = vmatprep.subr.bf16.mxu0 0
  %1743 = vmatpush2.bf16.msra.mxu0 %v1476
  %1744 = vmatprep.subr.bf16.mxu0 0
  %1745 = vmatpush2.bf16.msra.mxu0 %v1475
  %1746 = vmatprep.subr.bf16.mxu0 0
  %1747 = vmatpush2.bf16.msra.mxu0 %v1474
  %1748 = vmatprep.subr.bf16.mxu0 0
  %1749 = vmatpush2.bf16.msra.mxu0 %v1473
  %1750 = vmatprep.subr.bf16.mxu0 0
  %1751 = vmatpush2.bf16.msra.mxu0 %v1472
  %1752 = vmatprep.mubr.bf16.mxu0 %v729
  %1753 = vmatmul.mubr.bf16.gmra.mxu0 %v728
  %v1754 = vpop.f32.mrf.mxu0
  %v1755 = vadd.f32 %v390, %v1754
  %v1756 = vpop.f32.mrf.mxu0
  %v1757 = vpop.f32.mrf.mxu0
  %v1758 = vadd.f32 %v390, %v1757
  %v1759 = vpop.f32.mrf.mxu0
  %1760 = vmatprep.mubr.bf16.mxu0 %v745
  %1761 = vmatmul.mubr.bf16.gmra.mxu0 %v744
  %v1762 = vpop.f32.mrf.mxu0
  %v1763 = vadd.f32 %v390, %v1762
  %v1764 = vpop.f32.mrf.mxu0
  %v1765 = vpop.f32.mrf.mxu0
  %v1766 = vadd.f32 %v390, %v1765
  %v1767 = vpop.f32.mrf.mxu0
  %1768 = vmatprep.mubr.bf16.mxu0 %v761
  %1769 = vmatmul.mubr.bf16.gmra.mxu0 %v760
  %v1770 = vpop.f32.mrf.mxu0
  %v1771 = vadd.f32 %v390, %v1770
  %v1772 = vpop.f32.mrf.mxu0
  %v1773 = vpop.f32.mrf.mxu0
  %v1774 = vadd.f32 %v390, %v1773
  %v1775 = vpop.f32.mrf.mxu0
  %1776 = vmatprep.mubr.bf16.mxu0 %v777
  %1777 = vmatmul.mubr.bf16.gmra.mxu0 %v776
  %v1778 = vpop.f32.mrf.mxu0
  %v1779 = vadd.f32 %v390, %v1778
  %v1780 = vpop.f32.mrf.mxu0
  %v1781 = vpop.f32.mrf.mxu0
  %v1782 = vadd.f32 %v390, %v1781
  %v1783 = vpop.f32.mrf.mxu0
  %1784 = vmatprep.mubr.bf16.mxu0 %v793
  %1785 = vmatmul.mubr.bf16.gmra.mxu0 %v792
  %v1786 = vpop.f32.mrf.mxu0
  %v1787 = vadd.f32 %v390, %v1786
  %v1788 = vpop.f32.mrf.mxu0
  %v1789 = vpop.f32.mrf.mxu0
  %v1790 = vadd.f32 %v390, %v1789
  %v1791 = vpop.f32.mrf.mxu0
  %1792 = vmatprep.mubr.bf16.mxu0 %v809
  %1793 = vmatmul.mubr.bf16.gmra.mxu0 %v808
  %v1794 = vpop.f32.mrf.mxu0
  %v1795 = vadd.f32 %v390, %v1794
  %v1796 = vpop.f32.mrf.mxu0
  %v1797 = vpop.f32.mrf.mxu0
  %v1798 = vadd.f32 %v390, %v1797
  %v1799 = vpop.f32.mrf.mxu0
  %1800 = vmatprep.mubr.bf16.mxu0 %v825
  %1801 = vmatmul.mubr.bf16.gmra.mxu0 %v824
  %v1802 = vpop.f32.mrf.mxu0
  %v1803 = vadd.f32 %v390, %v1802
  %v1804 = vpop.f32.mrf.mxu0
  %v1805 = vpop.f32.mrf.mxu0
  %v1806 = vadd.f32 %v390, %v1805
  %v1807 = vpop.f32.mrf.mxu0
  %1808 = vdwg.mxu0
  %1809 = vmatprep.subr.bf16.mxu0 0
  %1810 = vmatpush1.bf16.msra.mxu0 %v1487
  %1811 = vmatprep.subr.bf16.mxu0 0
  %1812 = vmatpush1.bf16.msra.mxu0 %v1486
  %1813 = vmatprep.subr.bf16.mxu0 0
  %1814 = vmatpush1.bf16.msra.mxu0 %v1485
  %1815 = vmatprep.subr.bf16.mxu0 0
  %1816 = vmatpush1.bf16.msra.mxu0 %v1484
  %1817 = vmatprep.subr.bf16.mxu0 0
  %1818 = vmatpush1.bf16.msra.mxu0 %v1483
  %1819 = vmatprep.subr.bf16.mxu0 0
  %1820 = vmatpush1.bf16.msra.mxu0 %v1482
  %1821 = vmatprep.subr.bf16.mxu0 0
  %1822 = vmatpush1.bf16.msra.mxu0 %v1481
  %1823 = vmatprep.subr.bf16.mxu0 0
  %1824 = vmatpush1.bf16.msra.mxu0 %v1480
  %1825 = vmatprep.subr.bf16.mxu0 0
  %1826 = vmatpush2.bf16.msra.mxu0 %v1495
  %1827 = vmatprep.subr.bf16.mxu0 0
  %1828 = vmatpush2.bf16.msra.mxu0 %v1494
  %1829 = vmatprep.subr.bf16.mxu0 0
  %1830 = vmatpush2.bf16.msra.mxu0 %v1493
  %1831 = vmatprep.subr.bf16.mxu0 0
  %1832 = vmatpush2.bf16.msra.mxu0 %v1492
  %1833 = vmatprep.subr.bf16.mxu0 0
  %1834 = vmatpush2.bf16.msra.mxu0 %v1491
  %1835 = vmatprep.subr.bf16.mxu0 0
  %1836 = vmatpush2.bf16.msra.mxu0 %v1490
  %1837 = vmatprep.subr.bf16.mxu0 0
  %1838 = vmatpush2.bf16.msra.mxu0 %v1489
  %1839 = vmatprep.subr.bf16.mxu0 0
  %1840 = vmatpush2.bf16.msra.mxu0 %v1488
  %1841 = vmatprep.mubr.bf16.mxu0 %v731
  %1842 = vmatmul.mubr.bf16.gmra.mxu0 %v730
  %v1843 = vpop.f32.mrf.mxu0
  %v1844 = vadd.f32 %v1755, %v1843
  %v1845 = vpop.f32.mrf.mxu0
  %v1846 = vpop.f32.mrf.mxu0
  %v1847 = vadd.f32 %v1758, %v1846
  %v1848 = vpop.f32.mrf.mxu0
  %1849 = vmatprep.mubr.bf16.mxu0 %v747
  %1850 = vmatmul.mubr.bf16.gmra.mxu0 %v746
  %v1851 = vpop.f32.mrf.mxu0
  %v1852 = vadd.f32 %v1763, %v1851
  %v1853 = vpop.f32.mrf.mxu0
  %v1854 = vpop.f32.mrf.mxu0
  %v1855 = vadd.f32 %v1766, %v1854
  %v1856 = vpop.f32.mrf.mxu0
  %1857 = vmatprep.mubr.bf16.mxu0 %v763
  %1858 = vmatmul.mubr.bf16.gmra.mxu0 %v762
  %v1859 = vpop.f32.mrf.mxu0
  %v1860 = vadd.f32 %v1771, %v1859
  %v1861 = vpop.f32.mrf.mxu0
  %v1862 = vpop.f32.mrf.mxu0
  %v1863 = vadd.f32 %v1774, %v1862
  %v1864 = vpop.f32.mrf.mxu0
  %1865 = vmatprep.mubr.bf16.mxu0 %v779
  %1866 = vmatmul.mubr.bf16.gmra.mxu0 %v778
  %v1867 = vpop.f32.mrf.mxu0
  %v1868 = vadd.f32 %v1779, %v1867
  %v1869 = vpop.f32.mrf.mxu0
  %v1870 = vpop.f32.mrf.mxu0
  %v1871 = vadd.f32 %v1782, %v1870
  %v1872 = vpop.f32.mrf.mxu0
  %1873 = vmatprep.mubr.bf16.mxu0 %v795
  %1874 = vmatmul.mubr.bf16.gmra.mxu0 %v794
  %v1875 = vpop.f32.mrf.mxu0
  %v1876 = vadd.f32 %v1787, %v1875
  %v1877 = vpop.f32.mrf.mxu0
  %v1878 = vpop.f32.mrf.mxu0
  %v1879 = vadd.f32 %v1790, %v1878
  %v1880 = vpop.f32.mrf.mxu0
  %1881 = vmatprep.mubr.bf16.mxu0 %v811
  %1882 = vmatmul.mubr.bf16.gmra.mxu0 %v810
  %v1883 = vpop.f32.mrf.mxu0
  %v1884 = vadd.f32 %v1795, %v1883
  %v1885 = vpop.f32.mrf.mxu0
  %v1886 = vpop.f32.mrf.mxu0
  %v1887 = vadd.f32 %v1798, %v1886
  %v1888 = vpop.f32.mrf.mxu0
  %1889 = vmatprep.mubr.bf16.mxu0 %v827
  %1890 = vmatmul.mubr.bf16.gmra.mxu0 %v826
  %v1891 = vpop.f32.mrf.mxu0
  %v1892 = vadd.f32 %v1803, %v1891
  %v1893 = vpop.f32.mrf.mxu0
  %v1894 = vpop.f32.mrf.mxu0
  %v1895 = vadd.f32 %v1806, %v1894
  %v1896 = vpop.f32.mrf.mxu0
  %1897 = vdwg.mxu0
  %1898 = vmatprep.subr.bf16.mxu0 0
  %1899 = vmatpush1.bf16.msra.mxu0 %v1503
  %1900 = vmatprep.subr.bf16.mxu0 0
  %1901 = vmatpush1.bf16.msra.mxu0 %v1502
  %1902 = vmatprep.subr.bf16.mxu0 0
  %1903 = vmatpush1.bf16.msra.mxu0 %v1501
  %1904 = vmatprep.subr.bf16.mxu0 0
  %1905 = vmatpush1.bf16.msra.mxu0 %v1500
  %1906 = vmatprep.subr.bf16.mxu0 0
  %1907 = vmatpush1.bf16.msra.mxu0 %v1499
  %1908 = vmatprep.subr.bf16.mxu0 0
  %1909 = vmatpush1.bf16.msra.mxu0 %v1498
  %1910 = vmatprep.subr.bf16.mxu0 0
  %1911 = vmatpush1.bf16.msra.mxu0 %v1497
  %1912 = vmatprep.subr.bf16.mxu0 0
  %1913 = vmatpush1.bf16.msra.mxu0 %v1496
  %1914 = vmatprep.subr.bf16.mxu0 0
  %1915 = vmatpush2.bf16.msra.mxu0 %v1511
  %1916 = vmatprep.subr.bf16.mxu0 0
  %1917 = vmatpush2.bf16.msra.mxu0 %v1510
  %1918 = vmatprep.subr.bf16.mxu0 0
  %1919 = vmatpush2.bf16.msra.mxu0 %v1509
  %1920 = vmatprep.subr.bf16.mxu0 0
  %1921 = vmatpush2.bf16.msra.mxu0 %v1508
  %1922 = vmatprep.subr.bf16.mxu0 0
  %1923 = vmatpush2.bf16.msra.mxu0 %v1507
  %1924 = vmatprep.subr.bf16.mxu0 0
  %1925 = vmatpush2.bf16.msra.mxu0 %v1506
  %1926 = vmatprep.subr.bf16.mxu0 0
  %1927 = vmatpush2.bf16.msra.mxu0 %v1505
  %1928 = vmatprep.subr.bf16.mxu0 0
  %1929 = vmatpush2.bf16.msra.mxu0 %v1504
  %1930 = vmatprep.mubr.bf16.mxu0 %v733
  %1931 = vmatmul.mubr.bf16.gmra.mxu0 %v732
  %v1932 = vpop.f32.mrf.mxu0
  %v1933 = vadd.f32 %v1844, %v1932
  %v1934 = vpop.f32.mrf.mxu0
  %v1935 = vpop.f32.mrf.mxu0
  %v1936 = vadd.f32 %v1847, %v1935
  %v1937 = vpop.f32.mrf.mxu0
  %1938 = vmatprep.mubr.bf16.mxu0 %v749
  %1939 = vmatmul.mubr.bf16.gmra.mxu0 %v748
  %v1940 = vpop.f32.mrf.mxu0
  %v1941 = vadd.f32 %v1852, %v1940
  %v1942 = vpop.f32.mrf.mxu0
  %v1943 = vpop.f32.mrf.mxu0
  %v1944 = vadd.f32 %v1855, %v1943
  %v1945 = vpop.f32.mrf.mxu0
  %1946 = vmatprep.mubr.bf16.mxu0 %v765
  %1947 = vmatmul.mubr.bf16.gmra.mxu0 %v764
  %v1948 = vpop.f32.mrf.mxu0
  %v1949 = vadd.f32 %v1860, %v1948
  %v1950 = vpop.f32.mrf.mxu0
  %v1951 = vpop.f32.mrf.mxu0
  %v1952 = vadd.f32 %v1863, %v1951
  %v1953 = vpop.f32.mrf.mxu0
  %1954 = vmatprep.mubr.bf16.mxu0 %v781
  %1955 = vmatmul.mubr.bf16.gmra.mxu0 %v780
  %v1956 = vpop.f32.mrf.mxu0
  %v1957 = vadd.f32 %v1868, %v1956
  %v1958 = vpop.f32.mrf.mxu0
  %v1959 = vpop.f32.mrf.mxu0
  %v1960 = vadd.f32 %v1871, %v1959
  %v1961 = vpop.f32.mrf.mxu0
  %1962 = vmatprep.mubr.bf16.mxu0 %v797
  %1963 = vmatmul.mubr.bf16.gmra.mxu0 %v796
  %v1964 = vpop.f32.mrf.mxu0
  %v1965 = vadd.f32 %v1876, %v1964
  %v1966 = vpop.f32.mrf.mxu0
  %v1967 = vpop.f32.mrf.mxu0
  %v1968 = vadd.f32 %v1879, %v1967
  %v1969 = vpop.f32.mrf.mxu0
  %1970 = vmatprep.mubr.bf16.mxu0 %v813
  %1971 = vmatmul.mubr.bf16.gmra.mxu0 %v812
  %v1972 = vpop.f32.mrf.mxu0
  %v1973 = vadd.f32 %v1884, %v1972
  %v1974 = vpop.f32.mrf.mxu0
  %v1975 = vpop.f32.mrf.mxu0
  %v1976 = vadd.f32 %v1887, %v1975
  %v1977 = vpop.f32.mrf.mxu0
  %1978 = vmatprep.mubr.bf16.mxu0 %v829
  %1979 = vmatmul.mubr.bf16.gmra.mxu0 %v828
  %v1980 = vpop.f32.mrf.mxu0
  %v1981 = vadd.f32 %v1892, %v1980
  %v1982 = vpop.f32.mrf.mxu0
  %v1983 = vpop.f32.mrf.mxu0
  %v1984 = vadd.f32 %v1895, %v1983
  %v1985 = vpop.f32.mrf.mxu0
  %1986 = vdwg.mxu0
  %1987 = vmatprep.subr.bf16.mxu0 0
  %1988 = vmatpush1.bf16.msra.mxu0 %v1519
  %1989 = vmatprep.subr.bf16.mxu0 0
  %1990 = vmatpush1.bf16.msra.mxu0 %v1518
  %1991 = vmatprep.subr.bf16.mxu0 0
  %1992 = vmatpush1.bf16.msra.mxu0 %v1517
  %1993 = vmatprep.subr.bf16.mxu0 0
  %1994 = vmatpush1.bf16.msra.mxu0 %v1516
  %1995 = vmatprep.subr.bf16.mxu0 0
  %1996 = vmatpush1.bf16.msra.mxu0 %v1515
  %1997 = vmatprep.subr.bf16.mxu0 0
  %1998 = vmatpush1.bf16.msra.mxu0 %v1514
  %1999 = vmatprep.subr.bf16.mxu0 0
  %2000 = vmatpush1.bf16.msra.mxu0 %v1513
  %2001 = vmatprep.subr.bf16.mxu0 0
  %2002 = vmatpush1.bf16.msra.mxu0 %v1512
  %2003 = vmatprep.subr.bf16.mxu0 0
  %2004 = vmatpush2.bf16.msra.mxu0 %v1527
  %2005 = vmatprep.subr.bf16.mxu0 0
  %2006 = vmatpush2.bf16.msra.mxu0 %v1526
  %2007 = vmatprep.subr.bf16.mxu0 0
  %2008 = vmatpush2.bf16.msra.mxu0 %v1525
  %2009 = vmatprep.subr.bf16.mxu0 0
  %2010 = vmatpush2.bf16.msra.mxu0 %v1524
  %2011 = vmatprep.subr.bf16.mxu0 0
  %2012 = vmatpush2.bf16.msra.mxu0 %v1523
  %2013 = vmatprep.subr.bf16.mxu0 0
  %2014 = vmatpush2.bf16.msra.mxu0 %v1522
  %2015 = vmatprep.subr.bf16.mxu0 0
  %2016 = vmatpush2.bf16.msra.mxu0 %v1521
  %2017 = vmatprep.subr.bf16.mxu0 0
  %2018 = vmatpush2.bf16.msra.mxu0 %v1520
  %2019 = vmatprep.mubr.bf16.mxu0 %v735
  %2020 = vmatmul.mubr.bf16.gmra.mxu0 %v734
  %v2021 = vpop.f32.mrf.mxu0
  %v2022 = vadd.f32 %v1933, %v2021
  %v2023 = vpop.f32.mrf.mxu0
  %v2024 = vpop.f32.mrf.mxu0
  %v2025 = vadd.f32 %v1936, %v2024
  %v2026 = vpop.f32.mrf.mxu0
  %2027 = vmatprep.mubr.bf16.mxu0 %v751
  %2028 = vmatmul.mubr.bf16.gmra.mxu0 %v750
  %v2029 = vpop.f32.mrf.mxu0
  %v2030 = vadd.f32 %v1941, %v2029
  %v2031 = vpop.f32.mrf.mxu0
  %v2032 = vpop.f32.mrf.mxu0
  %v2033 = vadd.f32 %v1944, %v2032
  %v2034 = vpop.f32.mrf.mxu0
  %2035 = vmatprep.mubr.bf16.mxu0 %v767
  %2036 = vmatmul.mubr.bf16.gmra.mxu0 %v766
  %v2037 = vpop.f32.mrf.mxu0
  %v2038 = vadd.f32 %v1949, %v2037
  %v2039 = vpop.f32.mrf.mxu0
  %v2040 = vpop.f32.mrf.mxu0
  %v2041 = vadd.f32 %v1952, %v2040
  %v2042 = vpop.f32.mrf.mxu0
  %2043 = vmatprep.mubr.bf16.mxu0 %v783
  %2044 = vmatmul.mubr.bf16.gmra.mxu0 %v782
  %v2045 = vpop.f32.mrf.mxu0
  %v2046 = vadd.f32 %v1957, %v2045
  %v2047 = vpop.f32.mrf.mxu0
  %v2048 = vpop.f32.mrf.mxu0
  %v2049 = vadd.f32 %v1960, %v2048
  %v2050 = vpop.f32.mrf.mxu0
  %2051 = vmatprep.mubr.bf16.mxu0 %v799
  %2052 = vmatmul.mubr.bf16.gmra.mxu0 %v798
  %v2053 = vpop.f32.mrf.mxu0
  %v2054 = vadd.f32 %v1965, %v2053
  %v2055 = vpop.f32.mrf.mxu0
  %v2056 = vpop.f32.mrf.mxu0
  %v2057 = vadd.f32 %v1968, %v2056
  %v2058 = vpop.f32.mrf.mxu0
  %2059 = vmatprep.mubr.bf16.mxu0 %v815
  %2060 = vmatmul.mubr.bf16.gmra.mxu0 %v814
  %v2061 = vpop.f32.mrf.mxu0
  %v2062 = vadd.f32 %v1973, %v2061
  %v2063 = vpop.f32.mrf.mxu0
  %v2064 = vpop.f32.mrf.mxu0
  %v2065 = vadd.f32 %v1976, %v2064
  %v2066 = vpop.f32.mrf.mxu0
  %2067 = vmatprep.mubr.bf16.mxu0 %v831
  %2068 = vmatmul.mubr.bf16.gmra.mxu0 %v830
  %v2069 = vpop.f32.mrf.mxu0
  %v2070 = vadd.f32 %v1981, %v2069
  %v2071 = vpop.f32.mrf.mxu0
  %v2072 = vpop.f32.mrf.mxu0
  %v2073 = vadd.f32 %v1984, %v2072
  %v2074 = vpop.f32.mrf.mxu0
  %2075 = vdwg.mxu0
  %2076 = vmatprep.subr.bf16.mxu0 0
  %2077 = vmatpush1.bf16.msra.mxu0 %v1535
  %2078 = vmatprep.subr.bf16.mxu0 0
  %2079 = vmatpush1.bf16.msra.mxu0 %v1534
  %2080 = vmatprep.subr.bf16.mxu0 0
  %2081 = vmatpush1.bf16.msra.mxu0 %v1533
  %2082 = vmatprep.subr.bf16.mxu0 0
  %2083 = vmatpush1.bf16.msra.mxu0 %v1532
  %2084 = vmatprep.subr.bf16.mxu0 0
  %2085 = vmatpush1.bf16.msra.mxu0 %v1531
  %2086 = vmatprep.subr.bf16.mxu0 0
  %2087 = vmatpush1.bf16.msra.mxu0 %v1530
  %2088 = vmatprep.subr.bf16.mxu0 0
  %2089 = vmatpush1.bf16.msra.mxu0 %v1529
  %2090 = vmatprep.subr.bf16.mxu0 0
  %2091 = vmatpush1.bf16.msra.mxu0 %v1528
  %2092 = vmatprep.subr.bf16.mxu0 0
  %2093 = vmatpush2.bf16.msra.mxu0 %v1543
  %2094 = vmatprep.subr.bf16.mxu0 0
  %2095 = vmatpush2.bf16.msra.mxu0 %v1542
  %2096 = vmatprep.subr.bf16.mxu0 0
  %2097 = vmatpush2.bf16.msra.mxu0 %v1541
  %2098 = vmatprep.subr.bf16.mxu0 0
  %2099 = vmatpush2.bf16.msra.mxu0 %v1540
  %2100 = vmatprep.subr.bf16.mxu0 0
  %2101 = vmatpush2.bf16.msra.mxu0 %v1539
  %2102 = vmatprep.subr.bf16.mxu0 0
  %2103 = vmatpush2.bf16.msra.mxu0 %v1538
  %2104 = vmatprep.subr.bf16.mxu0 0
  %2105 = vmatpush2.bf16.msra.mxu0 %v1537
  %2106 = vmatprep.subr.bf16.mxu0 0
  %2107 = vmatpush2.bf16.msra.mxu0 %v1536
  %2108 = vmatprep.mubr.bf16.mxu0 %v737
  %2109 = vmatmul.mubr.bf16.gmra.mxu0 %v736
  %v2110 = vpop.f32.mrf.mxu0
  %v2111 = vadd.f32 %v2022, %v2110
  %v2112 = vpop.f32.mrf.mxu0
  %v2113 = vpop.f32.mrf.mxu0
  %v2114 = vadd.f32 %v2025, %v2113
  %v2115 = vpop.f32.mrf.mxu0
  %2116 = vmatprep.mubr.bf16.mxu0 %v753
  %2117 = vmatmul.mubr.bf16.gmra.mxu0 %v752
  %v2118 = vpop.f32.mrf.mxu0
  %v2119 = vadd.f32 %v2030, %v2118
  %v2120 = vpop.f32.mrf.mxu0
  %v2121 = vpop.f32.mrf.mxu0
  %v2122 = vadd.f32 %v2033, %v2121
  %v2123 = vpop.f32.mrf.mxu0
  %2124 = vmatprep.mubr.bf16.mxu0 %v769
  %2125 = vmatmul.mubr.bf16.gmra.mxu0 %v768
  %v2126 = vpop.f32.mrf.mxu0
  %v2127 = vadd.f32 %v2038, %v2126
  %v2128 = vpop.f32.mrf.mxu0
  %v2129 = vpop.f32.mrf.mxu0
  %v2130 = vadd.f32 %v2041, %v2129
  %v2131 = vpop.f32.mrf.mxu0
  %2132 = vmatprep.mubr.bf16.mxu0 %v785
  %2133 = vmatmul.mubr.bf16.gmra.mxu0 %v784
  %v2134 = vpop.f32.mrf.mxu0
  %v2135 = vadd.f32 %v2046, %v2134
  %v2136 = vpop.f32.mrf.mxu0
  %v2137 = vpop.f32.mrf.mxu0
  %v2138 = vadd.f32 %v2049, %v2137
  %v2139 = vpop.f32.mrf.mxu0
  %2140 = vmatprep.mubr.bf16.mxu0 %v801
  %2141 = vmatmul.mubr.bf16.gmra.mxu0 %v800
  %v2142 = vpop.f32.mrf.mxu0
  %v2143 = vadd.f32 %v2054, %v2142
  %v2144 = vpop.f32.mrf.mxu0
  %v2145 = vpop.f32.mrf.mxu0
  %v2146 = vadd.f32 %v2057, %v2145
  %v2147 = vpop.f32.mrf.mxu0
  %2148 = vmatprep.mubr.bf16.mxu0 %v817
  %2149 = vmatmul.mubr.bf16.gmra.mxu0 %v816
  %v2150 = vpop.f32.mrf.mxu0
  %v2151 = vadd.f32 %v2062, %v2150
  %v2152 = vpop.f32.mrf.mxu0
  %v2153 = vpop.f32.mrf.mxu0
  %v2154 = vadd.f32 %v2065, %v2153
  %v2155 = vpop.f32.mrf.mxu0
  %2156 = vmatprep.mubr.bf16.mxu0 %v833
  %2157 = vmatmul.mubr.bf16.gmra.mxu0 %v832
  %v2158 = vpop.f32.mrf.mxu0
  %v2159 = vadd.f32 %v2070, %v2158
  %v2160 = vpop.f32.mrf.mxu0
  %v2161 = vpop.f32.mrf.mxu0
  %v2162 = vadd.f32 %v2073, %v2161
  %v2163 = vpop.f32.mrf.mxu0
  %2164 = vdwg.mxu0
  %2165 = vmatprep.subr.bf16.mxu0 0
  %2166 = vmatpush1.bf16.msra.mxu0 %v1551
  %2167 = vmatprep.subr.bf16.mxu0 0
  %2168 = vmatpush1.bf16.msra.mxu0 %v1550
  %2169 = vmatprep.subr.bf16.mxu0 0
  %2170 = vmatpush1.bf16.msra.mxu0 %v1549
  %2171 = vmatprep.subr.bf16.mxu0 0
  %2172 = vmatpush1.bf16.msra.mxu0 %v1548
  %2173 = vmatprep.subr.bf16.mxu0 0
  %2174 = vmatpush1.bf16.msra.mxu0 %v1547
  %2175 = vmatprep.subr.bf16.mxu0 0
  %2176 = vmatpush1.bf16.msra.mxu0 %v1546
  %2177 = vmatprep.subr.bf16.mxu0 0
  %2178 = vmatpush1.bf16.msra.mxu0 %v1545
  %2179 = vmatprep.subr.bf16.mxu0 0
  %2180 = vmatpush1.bf16.msra.mxu0 %v1544
  %2181 = vmatprep.subr.bf16.mxu0 0
  %2182 = vmatpush2.bf16.msra.mxu0 %v1559
  %2183 = vmatprep.subr.bf16.mxu0 0
  %2184 = vmatpush2.bf16.msra.mxu0 %v1558
  %2185 = vmatprep.subr.bf16.mxu0 0
  %2186 = vmatpush2.bf16.msra.mxu0 %v1557
  %2187 = vmatprep.subr.bf16.mxu0 0
  %2188 = vmatpush2.bf16.msra.mxu0 %v1556
  %2189 = vmatprep.subr.bf16.mxu0 0
  %2190 = vmatpush2.bf16.msra.mxu0 %v1555
  %2191 = vmatprep.subr.bf16.mxu0 0
  %2192 = vmatpush2.bf16.msra.mxu0 %v1554
  %2193 = vmatprep.subr.bf16.mxu0 0
  %2194 = vmatpush2.bf16.msra.mxu0 %v1553
  %2195 = vmatprep.subr.bf16.mxu0 0
  %2196 = vmatpush2.bf16.msra.mxu0 %v1552
  %2197 = vmatprep.mubr.bf16.mxu0 %v739
  %2198 = vmatmul.mubr.bf16.gmra.mxu0 %v738
  %v2199 = vpop.f32.mrf.mxu0
  %v2200 = vadd.f32 %v2111, %v2199
  %v2201 = vpop.f32.mrf.mxu0
  %v2202 = vpop.f32.mrf.mxu0
  %v2203 = vadd.f32 %v2114, %v2202
  %v2204 = vpop.f32.mrf.mxu0
  %2205 = vmatprep.mubr.bf16.mxu0 %v755
  %2206 = vmatmul.mubr.bf16.gmra.mxu0 %v754
  %v2207 = vpop.f32.mrf.mxu0
  %v2208 = vadd.f32 %v2119, %v2207
  %v2209 = vpop.f32.mrf.mxu0
  %v2210 = vpop.f32.mrf.mxu0
  %v2211 = vadd.f32 %v2122, %v2210
  %v2212 = vpop.f32.mrf.mxu0
  %2213 = vmatprep.mubr.bf16.mxu0 %v771
  %2214 = vmatmul.mubr.bf16.gmra.mxu0 %v770
  %v2215 = vpop.f32.mrf.mxu0
  %v2216 = vadd.f32 %v2127, %v2215
  %v2217 = vpop.f32.mrf.mxu0
  %v2218 = vpop.f32.mrf.mxu0
  %v2219 = vadd.f32 %v2130, %v2218
  %v2220 = vpop.f32.mrf.mxu0
  %2221 = vmatprep.mubr.bf16.mxu0 %v787
  %2222 = vmatmul.mubr.bf16.gmra.mxu0 %v786
  %v2223 = vpop.f32.mrf.mxu0
  %v2224 = vadd.f32 %v2135, %v2223
  %v2225 = vpop.f32.mrf.mxu0
  %v2226 = vpop.f32.mrf.mxu0
  %v2227 = vadd.f32 %v2138, %v2226
  %v2228 = vpop.f32.mrf.mxu0
  %2229 = vmatprep.mubr.bf16.mxu0 %v803
  %2230 = vmatmul.mubr.bf16.gmra.mxu0 %v802
  %v2231 = vpop.f32.mrf.mxu0
  %v2232 = vadd.f32 %v2143, %v2231
  %v2233 = vpop.f32.mrf.mxu0
  %v2234 = vpop.f32.mrf.mxu0
  %v2235 = vadd.f32 %v2146, %v2234
  %v2236 = vpop.f32.mrf.mxu0
  %2237 = vmatprep.mubr.bf16.mxu0 %v819
  %2238 = vmatmul.mubr.bf16.gmra.mxu0 %v818
  %v2239 = vpop.f32.mrf.mxu0
  %v2240 = vadd.f32 %v2151, %v2239
  %v2241 = vpop.f32.mrf.mxu0
  %v2242 = vpop.f32.mrf.mxu0
  %v2243 = vadd.f32 %v2154, %v2242
  %v2244 = vpop.f32.mrf.mxu0
  %2245 = vmatprep.mubr.bf16.mxu0 %v835
  %2246 = vmatmul.mubr.bf16.gmra.mxu0 %v834
  %v2247 = vpop.f32.mrf.mxu0
  %v2248 = vadd.f32 %v2159, %v2247
  %v2249 = vpop.f32.mrf.mxu0
  %v2250 = vpop.f32.mrf.mxu0
  %v2251 = vadd.f32 %v2162, %v2250
  %v2252 = vpop.f32.mrf.mxu0
  %2253 = vdwg.mxu0
  %2254 = vmatprep.subr.bf16.mxu0 0
  %2255 = vmatpush1.bf16.msra.mxu0 %v1567
  %2256 = vmatprep.subr.bf16.mxu0 0
  %2257 = vmatpush1.bf16.msra.mxu0 %v1566
  %2258 = vmatprep.subr.bf16.mxu0 0
  %2259 = vmatpush1.bf16.msra.mxu0 %v1565
  %2260 = vmatprep.subr.bf16.mxu0 0
  %2261 = vmatpush1.bf16.msra.mxu0 %v1564
  %2262 = vmatprep.subr.bf16.mxu0 0
  %2263 = vmatpush1.bf16.msra.mxu0 %v1563
  %2264 = vmatprep.subr.bf16.mxu0 0
  %2265 = vmatpush1.bf16.msra.mxu0 %v1562
  %2266 = vmatprep.subr.bf16.mxu0 0
  %2267 = vmatpush1.bf16.msra.mxu0 %v1561
  %2268 = vmatprep.subr.bf16.mxu0 0
  %2269 = vmatpush1.bf16.msra.mxu0 %v1560
  %2270 = vmatprep.subr.bf16.mxu0 0
  %2271 = vmatpush2.bf16.msra.mxu0 %v1575
  %2272 = vmatprep.subr.bf16.mxu0 0
  %2273 = vmatpush2.bf16.msra.mxu0 %v1574
  %2274 = vmatprep.subr.bf16.mxu0 0
  %2275 = vmatpush2.bf16.msra.mxu0 %v1573
  %2276 = vmatprep.subr.bf16.mxu0 0
  %2277 = vmatpush2.bf16.msra.mxu0 %v1572
  %2278 = vmatprep.subr.bf16.mxu0 0
  %2279 = vmatpush2.bf16.msra.mxu0 %v1571
  %2280 = vmatprep.subr.bf16.mxu0 0
  %2281 = vmatpush2.bf16.msra.mxu0 %v1570
  %2282 = vmatprep.subr.bf16.mxu0 0
  %2283 = vmatpush2.bf16.msra.mxu0 %v1569
  %2284 = vmatprep.subr.bf16.mxu0 0
  %2285 = vmatpush2.bf16.msra.mxu0 %v1568
  %2286 = vmatprep.mubr.bf16.mxu0 %v741
  %2287 = vmatmul.mubr.bf16.gmra.mxu0 %v740
  %v2288 = vpop.f32.mrf.mxu0
  %v2289 = vadd.f32 %v2200, %v2288
  %v2290 = vpop.f32.mrf.mxu0
  %v2291 = vpop.f32.mrf.mxu0
  %v2292 = vadd.f32 %v2203, %v2291
  %v2293 = vpop.f32.mrf.mxu0
  %2294 = vmatprep.mubr.bf16.mxu0 %v757
  %2295 = vmatmul.mubr.bf16.gmra.mxu0 %v756
  %v2296 = vpop.f32.mrf.mxu0
  %v2297 = vadd.f32 %v2208, %v2296
  %v2298 = vpop.f32.mrf.mxu0
  %v2299 = vpop.f32.mrf.mxu0
  %v2300 = vadd.f32 %v2211, %v2299
  %v2301 = vpop.f32.mrf.mxu0
  %2302 = vmatprep.mubr.bf16.mxu0 %v773
  %2303 = vmatmul.mubr.bf16.gmra.mxu0 %v772
  %v2304 = vpop.f32.mrf.mxu0
  %v2305 = vadd.f32 %v2216, %v2304
  %v2306 = vpop.f32.mrf.mxu0
  %v2307 = vpop.f32.mrf.mxu0
  %v2308 = vadd.f32 %v2219, %v2307
  %v2309 = vpop.f32.mrf.mxu0
  %2310 = vmatprep.mubr.bf16.mxu0 %v789
  %2311 = vmatmul.mubr.bf16.gmra.mxu0 %v788
  %v2312 = vpop.f32.mrf.mxu0
  %v2313 = vadd.f32 %v2224, %v2312
  %v2314 = vpop.f32.mrf.mxu0
  %v2315 = vpop.f32.mrf.mxu0
  %v2316 = vadd.f32 %v2227, %v2315
  %v2317 = vpop.f32.mrf.mxu0
  %2318 = vmatprep.mubr.bf16.mxu0 %v805
  %2319 = vmatmul.mubr.bf16.gmra.mxu0 %v804
  %v2320 = vpop.f32.mrf.mxu0
  %v2321 = vadd.f32 %v2232, %v2320
  %v2322 = vpop.f32.mrf.mxu0
  %v2323 = vpop.f32.mrf.mxu0
  %v2324 = vadd.f32 %v2235, %v2323
  %v2325 = vpop.f32.mrf.mxu0
  %2326 = vmatprep.mubr.bf16.mxu0 %v821
  %2327 = vmatmul.mubr.bf16.gmra.mxu0 %v820
  %v2328 = vpop.f32.mrf.mxu0
  %v2329 = vadd.f32 %v2240, %v2328
  %v2330 = vpop.f32.mrf.mxu0
  %v2331 = vpop.f32.mrf.mxu0
  %v2332 = vadd.f32 %v2243, %v2331
  %v2333 = vpop.f32.mrf.mxu0
  %2334 = vmatprep.mubr.bf16.mxu0 %v837
  %2335 = vmatmul.mubr.bf16.gmra.mxu0 %v836
  %v2336 = vpop.f32.mrf.mxu0
  %v2337 = vadd.f32 %v2248, %v2336
  %v2338 = vpop.f32.mrf.mxu0
  %v2339 = vpop.f32.mrf.mxu0
  %v2340 = vadd.f32 %v2251, %v2339
  %v2341 = vpop.f32.mrf.mxu0
  %2342 = vdwg.mxu0
  %2343 = vmatprep.subr.bf16.mxu0 0
  %2344 = vmatpush1.bf16.msra.mxu0 %v1583
  %2345 = vmatprep.subr.bf16.mxu0 0
  %2346 = vmatpush1.bf16.msra.mxu0 %v1582
  %2347 = vmatprep.subr.bf16.mxu0 0
  %2348 = vmatpush1.bf16.msra.mxu0 %v1581
  %2349 = vmatprep.subr.bf16.mxu0 0
  %2350 = vmatpush1.bf16.msra.mxu0 %v1580
  %2351 = vmatprep.subr.bf16.mxu0 0
  %2352 = vmatpush1.bf16.msra.mxu0 %v1579
  %2353 = vmatprep.subr.bf16.mxu0 0
  %2354 = vmatpush1.bf16.msra.mxu0 %v1578
  %2355 = vmatprep.subr.bf16.mxu0 0
  %2356 = vmatpush1.bf16.msra.mxu0 %v1577
  %2357 = vmatprep.subr.bf16.mxu0 0
  %2358 = vmatpush1.bf16.msra.mxu0 %v1576
  %2359 = vmatprep.subr.bf16.mxu0 0
  %2360 = vmatpush2.bf16.msra.mxu0 %v1591
  %2361 = vmatprep.subr.bf16.mxu0 0
  %2362 = vmatpush2.bf16.msra.mxu0 %v1590
  %2363 = vmatprep.subr.bf16.mxu0 0
  %2364 = vmatpush2.bf16.msra.mxu0 %v1589
  %2365 = vmatprep.subr.bf16.mxu0 0
  %2366 = vmatpush2.bf16.msra.mxu0 %v1588
  %2367 = vmatprep.subr.bf16.mxu0 0
  %2368 = vmatpush2.bf16.msra.mxu0 %v1587
  %2369 = vmatprep.subr.bf16.mxu0 0
  %2370 = vmatpush2.bf16.msra.mxu0 %v1586
  %2371 = vmatprep.subr.bf16.mxu0 0
  %2372 = vmatpush2.bf16.msra.mxu0 %v1585
  %2373 = vmatprep.subr.bf16.mxu0 0
  %2374 = vmatpush2.bf16.msra.mxu0 %v1584
  %2375 = vmatprep.mubr.bf16.mxu0 %v743
  %2376 = vmatmul.mubr.bf16.gmra.mxu0 %v742
  %v2377 = vpop.f32.mrf.mxu0
  %v2378 = vadd.f32 %v2289, %v2377
  %v2379 = vpop.f32.mrf.mxu0
  %v2380 = vpop.f32.mrf.mxu0
  %v2381 = vadd.f32 %v2292, %v2380
  %v2382 = vpop.f32.mrf.mxu0
  %2383 = vmatprep.mubr.bf16.mxu0 %v759
  %2384 = vmatmul.mubr.bf16.gmra.mxu0 %v758
  %v2385 = vpop.f32.mrf.mxu0
  %v2386 = vadd.f32 %v2297, %v2385
  %v2387 = vpop.f32.mrf.mxu0
  %v2388 = vpop.f32.mrf.mxu0
  %v2389 = vadd.f32 %v2300, %v2388
  %v2390 = vpop.f32.mrf.mxu0
  %2391 = vmatprep.mubr.bf16.mxu0 %v775
  %2392 = vmatmul.mubr.bf16.gmra.mxu0 %v774
  %v2393 = vpop.f32.mrf.mxu0
  %v2394 = vadd.f32 %v2305, %v2393
  %v2395 = vpop.f32.mrf.mxu0
  %v2396 = vpop.f32.mrf.mxu0
  %v2397 = vadd.f32 %v2308, %v2396
  %v2398 = vpop.f32.mrf.mxu0
  %2399 = vmatprep.mubr.bf16.mxu0 %v791
  %2400 = vmatmul.mubr.bf16.gmra.mxu0 %v790
  %v2401 = vpop.f32.mrf.mxu0
  %v2402 = vadd.f32 %v2313, %v2401
  %v2403 = vpop.f32.mrf.mxu0
  %v2404 = vpop.f32.mrf.mxu0
  %v2405 = vadd.f32 %v2316, %v2404
  %v2406 = vpop.f32.mrf.mxu0
  %2407 = vmatprep.mubr.bf16.mxu0 %v807
  %2408 = vmatmul.mubr.bf16.gmra.mxu0 %v806
  %v2409 = vpop.f32.mrf.mxu0
  %v2410 = vadd.f32 %v2321, %v2409
  %v2411 = vpop.f32.mrf.mxu0
  %v2412 = vpop.f32.mrf.mxu0
  %v2413 = vadd.f32 %v2324, %v2412
  %v2414 = vpop.f32.mrf.mxu0
  %2415 = vmatprep.mubr.bf16.mxu0 %v823
  %2416 = vmatmul.mubr.bf16.gmra.mxu0 %v822
  %v2417 = vpop.f32.mrf.mxu0
  %v2418 = vadd.f32 %v2329, %v2417
  %v2419 = vpop.f32.mrf.mxu0
  %v2420 = vpop.f32.mrf.mxu0
  %v2421 = vadd.f32 %v2332, %v2420
  %v2422 = vpop.f32.mrf.mxu0
  %2423 = vmatprep.mubr.bf16.mxu0 %v839
  %2424 = vmatmul.mubr.bf16.gmra.mxu0 %v838
  %v2425 = vpop.f32.mrf.mxu0
  %v2426 = vadd.f32 %v2337, %v2425
  %v2427 = vpop.f32.mrf.mxu0
  %v2428 = vpop.f32.mrf.mxu0
  %v2429 = vadd.f32 %v2340, %v2428
  %v2430 = vpop.f32.mrf.mxu0
  %2431 = vdwg.mxu0
  %vm2432 = vcmask 130048
  %2433 = vst.msk [vmem:[%s3] sm:$0xff] %vm2432, %v2378
  %2434 = vst.msk [vmem:[%s3 + $0x8] sm:$0xff] %vm2432, %v2381
  %2435 = vst.msk [vmem:[%s3 + $0x10] sm:$0xff] %vm2432, %v2386
  %2436 = vst.msk [vmem:[%s3 + $0x18] sm:$0xff] %vm2432, %v2389
  %2437 = vst.msk [vmem:[%s3 + $0x20] sm:$0xff] %vm2432, %v2394
  %2438 = vst.msk [vmem:[%s3 + $0x28] sm:$0xff] %vm2432, %v2397
  %2439 = vst.msk [vmem:[%s3 + $0x30] sm:$0xff] %vm2432, %v2402
  %2440 = vst.msk [vmem:[%s3 + $0x38] sm:$0xff] %vm2432, %v2405
  %2441 = vst.msk [vmem:[%s3 + $0x40] sm:$0xff] %vm2432, %v2410
  %2442 = vst.msk [vmem:[%s3 + $0x48] sm:$0xff] %vm2432, %v2413
  %2443 = vst.msk [vmem:[%s3 + $0x50] sm:$0xff] %vm2432, %v2418
  %2444 = vst.msk [vmem:[%s3 + $0x58] sm:$0xff] %vm2432, %v2421
  %2445 = vst.msk [vmem:[%s3 + $0x60] sm:$0xff] %vm2432, %v2426
  %2446 = vst.msk [vmem:[%s3 + $0x68] sm:$0xff] %vm2432, %v2429
  loop: start=0, step=1, limit=2
  $region14: #{sam_forward.1} parent=0 // loop_pre_header
    _
  $region15: #{sam_forward.1} parent=0 // loop_header
    %s2448 = sphi 0, %s2452
    %p2449 = scmp.ge.s32.totalorder %s2448, 2
  $region16: #{sam_forward.1} parent=0 // loop_header_branch
    %2451 = sbr.rel (%p2449) target = $region20
  $region17: #{sam_forward.1} parent=0 // loop_body
    %s2453 = smul.u32 %s2448, 56
    %s2454 = scalar_lea.vmem %s3, %s2453
    %v2455 = vld [vmem:[%s2454] sm:$0xff]
    %v2456 = vld [vmem:[%s2454 + $0x8] sm:$0xff]
    %v2457 = vld [vmem:[%s2454 + $0x10] sm:$0xff]
    %v2458 = vld [vmem:[%s2454 + $0x18] sm:$0xff]
    %v2459 = vld [vmem:[%s2454 + $0x20] sm:$0xff]
    %v2460 = vld [vmem:[%s2454 + $0x28] sm:$0xff]
    %v2461 = vld [vmem:[%s2454 + $0x30] sm:$0xff]
    %v2462 = vmul.f32 %v2455, 0.020408163
    %v2463 = vmul.f32 %v2456, 0.020408163
    %v2464 = vmul.f32 %v2457, 0.020408163
    %v2465 = vmul.f32 %v2458, 0.020408163
    %v2466 = vmul.f32 %v2459, 0.020408163
    %v2467 = vmul.f32 %v2460, 0.020408163
    %v2468 = vmul.f32 %v2461, 0.020408163
    %v2469 = vpack.c.bf16 %v2463, %v2462
    %v2470 = vpack.c.bf16 %v2465, %v2464
    %v2471 = vpack.c.bf16 %v2467, %v2466
    %v2472 = vpack.c.bf16 %v2468, %v2468
    %s2473 = smul.u32 %s2448, 112
    %s2474 = smul.addr %s2473, 4
    %s2475 = scalar_lea.vmem %s0, %s2474
    %v2476 = vld [vmem:[%s2475] sm:$0xff]
    %v2477 = vld [vmem:[%s2475 + $0x8] sm:$0xff]
    %v2478 = vld [vmem:[%s2475 + $0x10] sm:$0xff]
    %v2479 = vld [vmem:[%s2475 + $0x18] sm:$0xff]
    %v2480 = vld [vmem:[%s2475 + $0x20] sm:$0xff]
    %v2481 = vld [vmem:[%s2475 + $0x28] sm:$0xff]
    %v2482 = vld [vmem:[%s2475 + $0x30] sm:$0xff]
    %v2483 = vld [vmem:[%s2475 + $0x38] sm:$0xff]
    %v2484 = vld [vmem:[%s2475 + $0x40] sm:$0xff]
    %v2485 = vld [vmem:[%s2475 + $0x48] sm:$0xff]
    %v2486 = vld [vmem:[%s2475 + $0x50] sm:$0xff]
    %v2487 = vld [vmem:[%s2475 + $0x58] sm:$0xff]
    %v2488 = vld [vmem:[%s2475 + $0x60] sm:$0xff]
    %v2489 = vld [vmem:[%s2475 + $0x68] sm:$0xff]
    %v2490 = vld [vmem:[%s2475 + $0x70] sm:$0xff]
    %v2491 = vld [vmem:[%s2475 + $0x78] sm:$0xff]
    %v2492 = vld [vmem:[%s2475 + $0x80] sm:$0xff]
    %v2493 = vld [vmem:[%s2475 + $0x88] sm:$0xff]
    %v2494 = vld [vmem:[%s2475 + $0x90] sm:$0xff]
    %v2495 = vld [vmem:[%s2475 + $0x98] sm:$0xff]
    %v2496 = vld [vmem:[%s2475 + $0xa0] sm:$0xff]
    %v2497 = vld [vmem:[%s2475 + $0xa8] sm:$0xff]
    %v2498 = vld [vmem:[%s2475 + $0xb0] sm:$0xff]
    %v2499 = vld [vmem:[%s2475 + $0xb8] sm:$0xff]
    %v2500 = vld [vmem:[%s2475 + $0xc0] sm:$0xff]
    %v2501 = vld [vmem:[%s2475 + $0xc8] sm:$0xff]
    %v2502 = vld [vmem:[%s2475 + $0xd0] sm:$0xff]
    %v2503 = vld [vmem:[%s2475 + $0xd8] sm:$0xff]
    %v2504 = vld [vmem:[%s2475 + $0xe0] sm:$0xff]
    %v2505 = vld [vmem:[%s2475 + $0xe8] sm:$0xff]
    %v2506 = vld [vmem:[%s2475 + $0xf0] sm:$0xff]
    %v2507 = vld [vmem:[%s2475 + $0xf8] sm:$0xff]
    %v2508 = vld [vmem:[%s2475 + $0x100] sm:$0xff]
    %v2509 = vld [vmem:[%s2475 + $0x108] sm:$0xff]
    %v2510 = vld [vmem:[%s2475 + $0x110] sm:$0xff]
    %v2511 = vld [vmem:[%s2475 + $0x118] sm:$0xff]
    %v2512 = vld [vmem:[%s2475 + $0x120] sm:$0xff]
    %v2513 = vld [vmem:[%s2475 + $0x128] sm:$0xff]
    %v2514 = vld [vmem:[%s2475 + $0x130] sm:$0xff]
    %v2515 = vld [vmem:[%s2475 + $0x138] sm:$0xff]
    %v2516 = vld [vmem:[%s2475 + $0x140] sm:$0xff]
    %v2517 = vld [vmem:[%s2475 + $0x148] sm:$0xff]
    %v2518 = vld [vmem:[%s2475 + $0x150] sm:$0xff]
    %v2519 = vld [vmem:[%s2475 + $0x158] sm:$0xff]
    %v2520 = vld [vmem:[%s2475 + $0x160] sm:$0xff]
    %v2521 = vld [vmem:[%s2475 + $0x168] sm:$0xff]
    %v2522 = vld [vmem:[%s2475 + $0x170] sm:$0xff]
    %v2523 = vld [vmem:[%s2475 + $0x178] sm:$0xff]
    %v2524 = vld [vmem:[%s2475 + $0x180] sm:$0xff]
    %v2525 = vld [vmem:[%s2475 + $0x188] sm:$0xff]
    %v2526 = vld [vmem:[%s2475 + $0x190] sm:$0xff]
    %v2527 = vld [vmem:[%s2475 + $0x198] sm:$0xff]
    %v2528 = vld [vmem:[%s2475 + $0x1a0] sm:$0xff]
    %v2529 = vld [vmem:[%s2475 + $0x1a8] sm:$0xff]
    %v2530 = vld [vmem:[%s2475 + $0x1b0] sm:$0xff]
    %v2531 = vld [vmem:[%s2475 + $0x1b8] sm:$0xff]
    %2532 = vxpose.xlu0.c.b16.start [1/8] %v2469, 128
    %2533 = vxpose.xlu0.c.b16.cont [2/8] %v2470, 128
    %2534 = vxpose.xlu0.c.b16.cont [3/8] %v2471, 128
    %2535 = vxpose.xlu0.c.b16.cont [4/8] %v2472, 128
    %2536 = vxpose.xlu0.c.b16.cont [5/8] 0, 128
    %2537 = vxpose.xlu0.c.b16.cont [6/8] 0, 128
    %2538 = vxpose.xlu0.c.b16.cont [7/8] 0, 128
    %2539 = vxpose.xlu0.c.b16.end [8/8] 0, 128
    %v2540 = vpop.trf.xlu0
    %v2541 = vpop.trf.xlu0
    %v2542 = vpop.trf.xlu0
    %v2543 = vpop.trf.xlu0
    %v2544 = vpop.trf.xlu0
    %v2545 = vpop.trf.xlu0
    %v2546 = vpop.trf.xlu0
    %v2547 = vpop.trf.xlu0
    %v2604 = vunpack.c.l.b16 %v2476
    %v2605 = vunpack.c.h.b16 %v2476
    %v2606 = vunpack.c.l.b16 %v2477
    %v2607 = vunpack.c.h.b16 %v2477
    %v2608 = vunpack.c.l.b16 %v2478
    %v2609 = vunpack.c.h.b16 %v2478
    %v2610 = vunpack.c.l.b16 %v2479
    %v2611 = vunpack.c.h.b16 %v2479
    %v2612 = vunpack.c.l.b16 %v2480
    %v2613 = vunpack.c.h.b16 %v2480
    %v2614 = vunpack.c.l.b16 %v2481
    %v2615 = vunpack.c.h.b16 %v2481
    %v2616 = vunpack.c.l.b16 %v2482
    %v2617 = vunpack.c.h.b16 %v2482
    %v2618 = vunpack.c.l.b16 %v2483
    %v2619 = vunpack.c.h.b16 %v2483
    %v2620 = vunpack.c.l.b16 %v2484
    %v2621 = vunpack.c.h.b16 %v2484
    %v2622 = vunpack.c.l.b16 %v2485
    %v2623 = vunpack.c.h.b16 %v2485
    %v2624 = vunpack.c.l.b16 %v2486
    %v2625 = vunpack.c.h.b16 %v2486
    %v2626 = vunpack.c.l.b16 %v2487
    %v2627 = vunpack.c.h.b16 %v2487
    %v2628 = vunpack.c.l.b16 %v2488
    %v2629 = vunpack.c.h.b16 %v2488
    %v2630 = vunpack.c.l.b16 %v2489
    %v2631 = vunpack.c.h.b16 %v2489
    %v2632 = vunpack.c.l.b16 %v2490
    %v2633 = vunpack.c.h.b16 %v2490
    %v2634 = vunpack.c.l.b16 %v2491
    %v2635 = vunpack.c.h.b16 %v2491
    %v2636 = vunpack.c.l.b16 %v2492
    %v2637 = vunpack.c.h.b16 %v2492
    %v2638 = vunpack.c.l.b16 %v2493
    %v2639 = vunpack.c.h.b16 %v2493
    %v2640 = vunpack.c.l.b16 %v2494
    %v2641 = vunpack.c.h.b16 %v2494
    %v2642 = vunpack.c.l.b16 %v2495
    %v2643 = vunpack.c.h.b16 %v2495
    %v2644 = vunpack.c.l.b16 %v2496
    %v2645 = vunpack.c.h.b16 %v2496
    %v2646 = vunpack.c.l.b16 %v2497
    %v2647 = vunpack.c.h.b16 %v2497
    %v2648 = vunpack.c.l.b16 %v2498
    %v2649 = vunpack.c.h.b16 %v2498
    %v2650 = vunpack.c.l.b16 %v2499
    %v2651 = vunpack.c.h.b16 %v2499
    %v2652 = vunpack.c.l.b16 %v2500
    %v2653 = vunpack.c.h.b16 %v2500
    %v2654 = vunpack.c.l.b16 %v2501
    %v2655 = vunpack.c.h.b16 %v2501
    %v2656 = vunpack.c.l.b16 %v2502
    %v2657 = vunpack.c.h.b16 %v2502
    %v2658 = vunpack.c.l.b16 %v2503
    %v2659 = vunpack.c.h.b16 %v2503
    %v2660 = vunpack.c.l.b16 %v2504
    %v2661 = vunpack.c.h.b16 %v2504
    %v2662 = vunpack.c.l.b16 %v2505
    %v2663 = vunpack.c.h.b16 %v2505
    %v2664 = vunpack.c.l.b16 %v2506
    %v2665 = vunpack.c.h.b16 %v2506
    %v2666 = vunpack.c.l.b16 %v2507
    %v2667 = vunpack.c.h.b16 %v2507
    %v2668 = vunpack.c.l.b16 %v2508
    %v2669 = vunpack.c.h.b16 %v2508
    %v2670 = vunpack.c.l.b16 %v2509
    %v2671 = vunpack.c.h.b16 %v2509
    %v2672 = vunpack.c.l.b16 %v2510
    %v2673 = vunpack.c.h.b16 %v2510
    %v2674 = vunpack.c.l.b16 %v2511
    %v2675 = vunpack.c.h.b16 %v2511
    %v2676 = vunpack.c.l.b16 %v2512
    %v2677 = vunpack.c.h.b16 %v2512
    %v2678 = vunpack.c.l.b16 %v2513
    %v2679 = vunpack.c.h.b16 %v2513
    %v2680 = vunpack.c.l.b16 %v2514
    %v2681 = vunpack.c.h.b16 %v2514
    %v2682 = vunpack.c.l.b16 %v2515
    %v2683 = vunpack.c.h.b16 %v2515
    %v2684 = vunpack.c.l.b16 %v2516
    %v2685 = vunpack.c.h.b16 %v2516
    %v2686 = vunpack.c.l.b16 %v2517
    %v2687 = vunpack.c.h.b16 %v2517
    %v2688 = vunpack.c.l.b16 %v2518
    %v2689 = vunpack.c.h.b16 %v2518
    %v2690 = vunpack.c.l.b16 %v2519
    %v2691 = vunpack.c.h.b16 %v2519
    %v2692 = vunpack.c.l.b16 %v2520
    %v2693 = vunpack.c.h.b16 %v2520
    %v2694 = vunpack.c.l.b16 %v2521
    %v2695 = vunpack.c.h.b16 %v2521
    %v2696 = vunpack.c.l.b16 %v2522
    %v2697 = vunpack.c.h.b16 %v2522
    %v2698 = vunpack.c.l.b16 %v2523
    %v2699 = vunpack.c.h.b16 %v2523
    %v2700 = vunpack.c.l.b16 %v2524
    %v2701 = vunpack.c.h.b16 %v2524
    %v2702 = vunpack.c.l.b16 %v2525
    %v2703 = vunpack.c.h.b16 %v2525
    %v2704 = vunpack.c.l.b16 %v2526
    %v2705 = vunpack.c.h.b16 %v2526
    %v2706 = vunpack.c.l.b16 %v2527
    %v2707 = vunpack.c.h.b16 %v2527
    %v2708 = vunpack.c.l.b16 %v2528
    %v2709 = vunpack.c.h.b16 %v2528
    %v2710 = vunpack.c.l.b16 %v2529
    %v2711 = vunpack.c.h.b16 %v2529
    %v2712 = vunpack.c.l.b16 %v2530
    %v2713 = vunpack.c.h.b16 %v2530
    %v2714 = vunpack.c.l.b16 %v2531
    %v2715 = vunpack.c.h.b16 %v2531
    %v2716 = vpack.c.b16 %v2620, %v2604
    %v2717 = vpack.c.b16 %v2621, %v2605
    %v2718 = vpack.c.b16 %v2622, %v2606
    %v2719 = vpack.c.b16 %v2623, %v2607
    %v2720 = vpack.c.b16 %v2624, %v2608
    %v2721 = vpack.c.b16 %v2625, %v2609
    %v2722 = vpack.c.b16 %v2626, %v2610
    %v2723 = vpack.c.b16 %v2627, %v2611
    %v2724 = vpack.c.b16 %v2628, %v2612
    %v2725 = vpack.c.b16 %v2629, %v2613
    %v2726 = vpack.c.b16 %v2630, %v2614
    %v2727 = vpack.c.b16 %v2631, %v2615
    %v2728 = vpack.c.b16 %v2632, %v2616
    %v2729 = vpack.c.b16 %v2633, %v2617
    %v2730 = vpack.c.b16 %v2634, %v2618
    %v2731 = vpack.c.b16 %v2635, %v2619
    %v2732 = vpack.c.b16 %v2652, %v2636
    %v2733 = vpack.c.b16 %v2653, %v2637
    %v2734 = vpack.c.b16 %v2654, %v2638
    %v2735 = vpack.c.b16 %v2655, %v2639
    %v2736 = vpack.c.b16 %v2656, %v2640
    %v2737 = vpack.c.b16 %v2657, %v2641
    %v2738 = vpack.c.b16 %v2658, %v2642
    %v2739 = vpack.c.b16 %v2659, %v2643
    %v2740 = vpack.c.b16 %v2660, %v2644
    %v2741 = vpack.c.b16 %v2661, %v2645
    %v2742 = vpack.c.b16 %v2662, %v2646
    %v2743 = vpack.c.b16 %v2663, %v2647
    %v2744 = vpack.c.b16 %v2664, %v2648
    %v2745 = vpack.c.b16 %v2665, %v2649
    %v2746 = vpack.c.b16 %v2666, %v2650
    %v2747 = vpack.c.b16 %v2667, %v2651
    %v2748 = vpack.c.b16 %v2684, %v2668
    %v2749 = vpack.c.b16 %v2685, %v2669
    %v2750 = vpack.c.b16 %v2686, %v2670
    %v2751 = vpack.c.b16 %v2687, %v2671
    %v2752 = vpack.c.b16 %v2688, %v2672
    %v2753 = vpack.c.b16 %v2689, %v2673
    %v2754 = vpack.c.b16 %v2690, %v2674
    %v2755 = vpack.c.b16 %v2691, %v2675
    %v2756 = vpack.c.b16 %v2692, %v2676
    %v2757 = vpack.c.b16 %v2693, %v2677
    %v2758 = vpack.c.b16 %v2694, %v2678
    %v2759 = vpack.c.b16 %v2695, %v2679
    %v2760 = vpack.c.b16 %v2696, %v2680
    %v2761 = vpack.c.b16 %v2697, %v2681
    %v2762 = vpack.c.b16 %v2698, %v2682
    %v2763 = vpack.c.b16 %v2699, %v2683
    %v2764 = vpack.c.b16 %v2700, %v2700
    %v2765 = vpack.c.b16 %v2701, %v2701
    %v2766 = vpack.c.b16 %v2702, %v2702
    %v2767 = vpack.c.b16 %v2703, %v2703
    %v2768 = vpack.c.b16 %v2704, %v2704
    %v2769 = vpack.c.b16 %v2705, %v2705
    %v2770 = vpack.c.b16 %v2706, %v2706
    %v2771 = vpack.c.b16 %v2707, %v2707
    %v2772 = vpack.c.b16 %v2708, %v2708
    %v2773 = vpack.c.b16 %v2709, %v2709
    %v2774 = vpack.c.b16 %v2710, %v2710
    %v2775 = vpack.c.b16 %v2711, %v2711
    %v2776 = vpack.c.b16 %v2712, %v2712
    %v2777 = vpack.c.b16 %v2713, %v2713
    %v2778 = vpack.c.b16 %v2714, %v2714
    %v2779 = vpack.c.b16 %v2715, %v2715
    %vm2828 = vcmask 457728
    %v2830 = vsel %vm2828, %v2540, 0
    %vm2832 = vcmask 1043456
    %v2834 = vsel %vm2832, %v2764, 0
    %v2837 = vsel %vm2832, %v2765, 0
    %v2840 = vsel %vm2832, %v2766, 0
    %v2843 = vsel %vm2832, %v2767, 0
    %v2846 = vsel %vm2832, %v2768, 0
    %v2849 = vsel %vm2832, %v2769, 0
    %v2852 = vsel %vm2832, %v2770, 0
    %v2855 = vsel %vm2832, %v2771, 0
    %v2858 = vsel %vm2832, %v2772, 0
    %v2861 = vsel %vm2832, %v2773, 0
    %v2864 = vsel %vm2832, %v2774, 0
    %v2867 = vsel %vm2832, %v2775, 0
    %v2870 = vsel %vm2832, %v2776, 0
    %v2873 = vsel %vm2832, %v2777, 0
    %v2876 = vsel %vm2832, %v2778, 0
    %v2879 = vsel %vm2832, %v2779, 0
    %2881 = vmatprep.subr.bf16.mxu0 0
    %2882 = vmatpush1.bf16.msra.mxu0 0
    %2883 = vmatprep.subr.bf16.mxu0 0
    %2884 = vmatpush1.bf16.msra.mxu0 0
    %2885 = vmatprep.subr.bf16.mxu0 0
    %2886 = vmatpush1.bf16.msra.mxu0 0
    %2887 = vmatprep.subr.bf16.mxu0 0
    %2888 = vmatpush1.bf16.msra.mxu0 0
    %2889 = vmatprep.subr.bf16.mxu0 %v2837
    %2890 = vmatpush1.bf16.msra.mxu0 %v2834
    %2891 = vmatprep.subr.bf16.mxu0 %v2749
    %2892 = vmatpush1.bf16.msra.mxu0 %v2748
    %2893 = vmatprep.subr.bf16.mxu0 %v2733
    %2894 = vmatpush1.bf16.msra.mxu0 %v2732
    %2895 = vmatprep.subr.bf16.mxu0 %v2717
    %2896 = vmatpush1.bf16.msra.mxu0 %v2716
    %2897 = vmatprep.subr.bf16.mxu0 0
    %2898 = vmatpush2.bf16.msra.mxu0 0
    %2899 = vmatprep.subr.bf16.mxu0 0
    %2900 = vmatpush2.bf16.msra.mxu0 0
    %2901 = vmatprep.subr.bf16.mxu0 0
    %2902 = vmatpush2.bf16.msra.mxu0 0
    %2903 = vmatprep.subr.bf16.mxu0 0
    %2904 = vmatpush2.bf16.msra.mxu0 0
    %2905 = vmatprep.subr.bf16.mxu0 0
    %2906 = vmatpush2.bf16.msra.mxu0 0
    %2907 = vmatprep.subr.bf16.mxu0 0
    %2908 = vmatpush2.bf16.msra.mxu0 0
    %2909 = vmatprep.subr.bf16.mxu0 0
    %2910 = vmatpush2.bf16.msra.mxu0 0
    %2911 = vmatprep.subr.bf16.mxu0 0
    %2912 = vmatpush2.bf16.msra.mxu0 0
    %2913 = vmatprep.mubr.bf16.mxu0 0
    %2914 = vmatmul.mubr.bf16.gmra.mxu0 %v2830
    %v2915 = vpop.f32.mrf.mxu0
    %v2916 = vadd.f32 0.0, %v2915
    %v2917 = vpop.f32.mrf.mxu0
    %v2918 = vadd.f32 0.0, %v2917
    %v2919 = vpop.f32.mrf.mxu0
    %v2920 = vadd.f32 0.0, %v2919
    %v2921 = vpop.f32.mrf.mxu0
    %v2922 = vadd.f32 0.0, %v2921
    %2923 = vdwg.mxu0
    %2924 = vmatprep.subr.bf16.mxu0 0
    %2925 = vmatpush1.bf16.msra.mxu0 0
    %2926 = vmatprep.subr.bf16.mxu0 0
    %2927 = vmatpush1.bf16.msra.mxu0 0
    %2928 = vmatprep.subr.bf16.mxu0 0
    %2929 = vmatpush1.bf16.msra.mxu0 0
    %2930 = vmatprep.subr.bf16.mxu0 0
    %2931 = vmatpush1.bf16.msra.mxu0 0
    %2932 = vmatprep.subr.bf16.mxu0 %v2843
    %2933 = vmatpush1.bf16.msra.mxu0 %v2840
    %2934 = vmatprep.subr.bf16.mxu0 %v2751
    %2935 = vmatpush1.bf16.msra.mxu0 %v2750
    %2936 = vmatprep.subr.bf16.mxu0 %v2735
    %2937 = vmatpush1.bf16.msra.mxu0 %v2734
    %2938 = vmatprep.subr.bf16.mxu0 %v2719
    %2939 = vmatpush1.bf16.msra.mxu0 %v2718
    %2940 = vmatprep.subr.bf16.mxu0 0
    %2941 = vmatpush2.bf16.msra.mxu0 0
    %2942 = vmatprep.subr.bf16.mxu0 0
    %2943 = vmatpush2.bf16.msra.mxu0 0
    %2944 = vmatprep.subr.bf16.mxu0 0
    %2945 = vmatpush2.bf16.msra.mxu0 0
    %2946 = vmatprep.subr.bf16.mxu0 0
    %2947 = vmatpush2.bf16.msra.mxu0 0
    %2948 = vmatprep.subr.bf16.mxu0 0
    %2949 = vmatpush2.bf16.msra.mxu0 0
    %2950 = vmatprep.subr.bf16.mxu0 0
    %2951 = vmatpush2.bf16.msra.mxu0 0
    %2952 = vmatprep.subr.bf16.mxu0 0
    %2953 = vmatpush2.bf16.msra.mxu0 0
    %2954 = vmatprep.subr.bf16.mxu0 0
    %2955 = vmatpush2.bf16.msra.mxu0 0
    %2956 = vmatprep.mubr.bf16.mxu0 0
    %2957 = vmatmul.mubr.bf16.gmra.mxu0 %v2830
    %v2958 = vpop.f32.mrf.mxu0
    %v2959 = vadd.f32 0.0, %v2958
    %v2960 = vpop.f32.mrf.mxu0
    %v2961 = vadd.f32 0.0, %v2960
    %v2962 = vpop.f32.mrf.mxu0
    %v2963 = vadd.f32 0.0, %v2962
    %v2964 = vpop.f32.mrf.mxu0
    %v2965 = vadd.f32 0.0, %v2964
    %2966 = vdwg.mxu0
    %2967 = vmatprep.subr.bf16.mxu0 0
    %2968 = vmatpush1.bf16.msra.mxu0 0
    %2969 = vmatprep.subr.bf16.mxu0 0
    %2970 = vmatpush1.bf16.msra.mxu0 0
    %2971 = vmatprep.subr.bf16.mxu0 0
    %2972 = vmatpush1.bf16.msra.mxu0 0
    %2973 = vmatprep.subr.bf16.mxu0 0
    %2974 = vmatpush1.bf16.msra.mxu0 0
    %2975 = vmatprep.subr.bf16.mxu0 %v2849
    %2976 = vmatpush1.bf16.msra.mxu0 %v2846
    %2977 = vmatprep.subr.bf16.mxu0 %v2753
    %2978 = vmatpush1.bf16.msra.mxu0 %v2752
    %2979 = vmatprep.subr.bf16.mxu0 %v2737
    %2980 = vmatpush1.bf16.msra.mxu0 %v2736
    %2981 = vmatprep.subr.bf16.mxu0 %v2721
    %2982 = vmatpush1.bf16.msra.mxu0 %v2720
    %2983 = vmatprep.subr.bf16.mxu0 0
    %2984 = vmatpush2.bf16.msra.mxu0 0
    %2985 = vmatprep.subr.bf16.mxu0 0
    %2986 = vmatpush2.bf16.msra.mxu0 0
    %2987 = vmatprep.subr.bf16.mxu0 0
    %2988 = vmatpush2.bf16.msra.mxu0 0
    %2989 = vmatprep.subr.bf16.mxu0 0
    %2990 = vmatpush2.bf16.msra.mxu0 0
    %2991 = vmatprep.subr.bf16.mxu0 0
    %2992 = vmatpush2.bf16.msra.mxu0 0
    %2993 = vmatprep.subr.bf16.mxu0 0
    %2994 = vmatpush2.bf16.msra.mxu0 0
    %2995 = vmatprep.subr.bf16.mxu0 0
    %2996 = vmatpush2.bf16.msra.mxu0 0
    %2997 = vmatprep.subr.bf16.mxu0 0
    %2998 = vmatpush2.bf16.msra.mxu0 0
    %2999 = vmatprep.mubr.bf16.mxu0 0
    %3000 = vmatmul.mubr.bf16.gmra.mxu0 %v2830
    %v3001 = vpop.f32.mrf.mxu0
    %v3002 = vadd.f32 0.0, %v3001
    %v3003 = vpop.f32.mrf.mxu0
    %v3004 = vadd.f32 0.0, %v3003
    %v3005 = vpop.f32.mrf.mxu0
    %v3006 = vadd.f32 0.0, %v3005
    %v3007 = vpop.f32.mrf.mxu0
    %v3008 = vadd.f32 0.0, %v3007
    %3009 = vdwg.mxu0
    %3010 = vmatprep.subr.bf16.mxu0 0
    %3011 = vmatpush1.bf16.msra.mxu0 0
    %3012 = vmatprep.subr.bf16.mxu0 0
    %3013 = vmatpush1.bf16.msra.mxu0 0
    %3014 = vmatprep.subr.bf16.mxu0 0
    %3015 = vmatpush1.bf16.msra.mxu0 0
    %3016 = vmatprep.subr.bf16.mxu0 0
    %3017 = vmatpush1.bf16.msra.mxu0 0
    %3018 = vmatprep.subr.bf16.mxu0 %v2855
    %3019 = vmatpush1.bf16.msra.mxu0 %v2852
    %3020 = vmatprep.subr.bf16.mxu0 %v2755
    %3021 = vmatpush1.bf16.msra.mxu0 %v2754
    %3022 = vmatprep.subr.bf16.mxu0 %v2739
    %3023 = vmatpush1.bf16.msra.mxu0 %v2738
    %3024 = vmatprep.subr.bf16.mxu0 %v2723
    %3025 = vmatpush1.bf16.msra.mxu0 %v2722
    %3026 = vmatprep.subr.bf16.mxu0 0
    %3027 = vmatpush2.bf16.msra.mxu0 0
    %3028 = vmatprep.subr.bf16.mxu0 0
    %3029 = vmatpush2.bf16.msra.mxu0 0
    %3030 = vmatprep.subr.bf16.mxu0 0
    %3031 = vmatpush2.bf16.msra.mxu0 0
    %3032 = vmatprep.subr.bf16.mxu0 0
    %3033 = vmatpush2.bf16.msra.mxu0 0
    %3034 = vmatprep.subr.bf16.mxu0 0
    %3035 = vmatpush2.bf16.msra.mxu0 0
    %3036 = vmatprep.subr.bf16.mxu0 0
    %3037 = vmatpush2.bf16.msra.mxu0 0
    %3038 = vmatprep.subr.bf16.mxu0 0
    %3039 = vmatpush2.bf16.msra.mxu0 0
    %3040 = vmatprep.subr.bf16.mxu0 0
    %3041 = vmatpush2.bf16.msra.mxu0 0
    %3042 = vmatprep.mubr.bf16.mxu0 0
    %3043 = vmatmul.mubr.bf16.gmra.mxu0 %v2830
    %v3044 = vpop.f32.mrf.mxu0
    %v3045 = vadd.f32 0.0, %v3044
    %v3046 = vpop.f32.mrf.mxu0
    %v3047 = vadd.f32 0.0, %v3046
    %v3048 = vpop.f32.mrf.mxu0
    %v3049 = vadd.f32 0.0, %v3048
    %v3050 = vpop.f32.mrf.mxu0
    %v3051 = vadd.f32 0.0, %v3050
    %3052 = vdwg.mxu0
    %3053 = vmatprep.subr.bf16.mxu0 0
    %3054 = vmatpush1.bf16.msra.mxu0 0
    %3055 = vmatprep.subr.bf16.mxu0 0
    %3056 = vmatpush1.bf16.msra.mxu0 0
    %3057 = vmatprep.subr.bf16.mxu0 0
    %3058 = vmatpush1.bf16.msra.mxu0 0
    %3059 = vmatprep.subr.bf16.mxu0 0
    %3060 = vmatpush1.bf16.msra.mxu0 0
    %3061 = vmatprep.subr.bf16.mxu0 %v2861
    %3062 = vmatpush1.bf16.msra.mxu0 %v2858
    %3063 = vmatprep.subr.bf16.mxu0 %v2757
    %3064 = vmatpush1.bf16.msra.mxu0 %v2756
    %3065 = vmatprep.subr.bf16.mxu0 %v2741
    %3066 = vmatpush1.bf16.msra.mxu0 %v2740
    %3067 = vmatprep.subr.bf16.mxu0 %v2725
    %3068 = vmatpush1.bf16.msra.mxu0 %v2724
    %3069 = vmatprep.subr.bf16.mxu0 0
    %3070 = vmatpush2.bf16.msra.mxu0 0
    %3071 = vmatprep.subr.bf16.mxu0 0
    %3072 = vmatpush2.bf16.msra.mxu0 0
    %3073 = vmatprep.subr.bf16.mxu0 0
    %3074 = vmatpush2.bf16.msra.mxu0 0
    %3075 = vmatprep.subr.bf16.mxu0 0
    %3076 = vmatpush2.bf16.msra.mxu0 0
    %3077 = vmatprep.subr.bf16.mxu0 0
    %3078 = vmatpush2.bf16.msra.mxu0 0
    %3079 = vmatprep.subr.bf16.mxu0 0
    %3080 = vmatpush2.bf16.msra.mxu0 0
    %3081 = vmatprep.subr.bf16.mxu0 0
    %3082 = vmatpush2.bf16.msra.mxu0 0
    %3083 = vmatprep.subr.bf16.mxu0 0
    %3084 = vmatpush2.bf16.msra.mxu0 0
    %3085 = vmatprep.mubr.bf16.mxu0 0
    %3086 = vmatmul.mubr.bf16.gmra.mxu0 %v2830
    %v3087 = vpop.f32.mrf.mxu0
    %v3088 = vadd.f32 0.0, %v3087
    %v3089 = vpop.f32.mrf.mxu0
    %v3090 = vadd.f32 0.0, %v3089
    %v3091 = vpop.f32.mrf.mxu0
    %v3092 = vadd.f32 0.0, %v3091
    %v3093 = vpop.f32.mrf.mxu0
    %v3094 = vadd.f32 0.0, %v3093
    %3095 = vdwg.mxu0
    %3096 = vmatprep.subr.bf16.mxu0 0
    %3097 = vmatpush1.bf16.msra.mxu0 0
    %3098 = vmatprep.subr.bf16.mxu0 0
    %3099 = vmatpush1.bf16.msra.mxu0 0
    %3100 = vmatprep.subr.bf16.mxu0 0
    %3101 = vmatpush1.bf16.msra.mxu0 0
    %3102 = vmatprep.subr.bf16.mxu0 0
    %3103 = vmatpush1.bf16.msra.mxu0 0
    %3104 = vmatprep.subr.bf16.mxu0 %v2867
    %3105 = vmatpush1.bf16.msra.mxu0 %v2864
    %3106 = vmatprep.subr.bf16.mxu0 %v2759
    %3107 = vmatpush1.bf16.msra.mxu0 %v2758
    %3108 = vmatprep.subr.bf16.mxu0 %v2743
    %3109 = vmatpush1.bf16.msra.mxu0 %v2742
    %3110 = vmatprep.subr.bf16.mxu0 %v2727
    %3111 = vmatpush1.bf16.msra.mxu0 %v2726
    %3112 = vmatprep.subr.bf16.mxu0 0
    %3113 = vmatpush2.bf16.msra.mxu0 0
    %3114 = vmatprep.subr.bf16.mxu0 0
    %3115 = vmatpush2.bf16.msra.mxu0 0
    %3116 = vmatprep.subr.bf16.mxu0 0
    %3117 = vmatpush2.bf16.msra.mxu0 0
    %3118 = vmatprep.subr.bf16.mxu0 0
    %3119 = vmatpush2.bf16.msra.mxu0 0
    %3120 = vmatprep.subr.bf16.mxu0 0
    %3121 = vmatpush2.bf16.msra.mxu0 0
    %3122 = vmatprep.subr.bf16.mxu0 0
    %3123 = vmatpush2.bf16.msra.mxu0 0
    %3124 = vmatprep.subr.bf16.mxu0 0
    %3125 = vmatpush2.bf16.msra.mxu0 0
    %3126 = vmatprep.subr.bf16.mxu0 0
    %3127 = vmatpush2.bf16.msra.mxu0 0
    %3128 = vmatprep.mubr.bf16.mxu0 0
    %3129 = vmatmul.mubr.bf16.gmra.mxu0 %v2830
    %v3130 = vpop.f32.mrf.mxu0
    %v3131 = vadd.f32 0.0, %v3130
    %v3132 = vpop.f32.mrf.mxu0
    %v3133 = vadd.f32 0.0, %v3132
    %v3134 = vpop.f32.mrf.mxu0
    %v3135 = vadd.f32 0.0, %v3134
    %v3136 = vpop.f32.mrf.mxu0
    %v3137 = vadd.f32 0.0, %v3136
    %3138 = vdwg.mxu0
    %3139 = vmatprep.subr.bf16.mxu0 0
    %3140 = vmatpush1.bf16.msra.mxu0 0
    %3141 = vmatprep.subr.bf16.mxu0 0
    %3142 = vmatpush1.bf16.msra.mxu0 0
    %3143 = vmatprep.subr.bf16.mxu0 0
    %3144 = vmatpush1.bf16.msra.mxu0 0
    %3145 = vmatprep.subr.bf16.mxu0 0
    %3146 = vmatpush1.bf16.msra.mxu0 0
    %3147 = vmatprep.subr.bf16.mxu0 %v2873
    %3148 = vmatpush1.bf16.msra.mxu0 %v2870
    %3149 = vmatprep.subr.bf16.mxu0 %v2761
    %3150 = vmatpush1.bf16.msra.mxu0 %v2760
    %3151 = vmatprep.subr.bf16.mxu0 %v2745
    %3152 = vmatpush1.bf16.msra.mxu0 %v2744
    %3153 = vmatprep.subr.bf16.mxu0 %v2729
    %3154 = vmatpush1.bf16.msra.mxu0 %v2728
    %3155 = vmatprep.subr.bf16.mxu0 0
    %3156 = vmatpush2.bf16.msra.mxu0 0
    %3157 = vmatprep.subr.bf16.mxu0 0
    %3158 = vmatpush2.bf16.msra.mxu0 0
    %3159 = vmatprep.subr.bf16.mxu0 0
    %3160 = vmatpush2.bf16.msra.mxu0 0
    %3161 = vmatprep.subr.bf16.mxu0 0
    %3162 = vmatpush2.bf16.msra.mxu0 0
    %3163 = vmatprep.subr.bf16.mxu0 0
    %3164 = vmatpush2.bf16.msra.mxu0 0
    %3165 = vmatprep.subr.bf16.mxu0 0
    %3166 = vmatpush2.bf16.msra.mxu0 0
    %3167 = vmatprep.subr.bf16.mxu0 0
    %3168 = vmatpush2.bf16.msra.mxu0 0
    %3169 = vmatprep.subr.bf16.mxu0 0
    %3170 = vmatpush2.bf16.msra.mxu0 0
    %3171 = vmatprep.mubr.bf16.mxu0 0
    %3172 = vmatmul.mubr.bf16.gmra.mxu0 %v2830
    %v3173 = vpop.f32.mrf.mxu0
    %v3174 = vadd.f32 0.0, %v3173
    %v3175 = vpop.f32.mrf.mxu0
    %v3176 = vadd.f32 0.0, %v3175
    %v3177 = vpop.f32.mrf.mxu0
    %v3178 = vadd.f32 0.0, %v3177
    %v3179 = vpop.f32.mrf.mxu0
    %v3180 = vadd.f32 0.0, %v3179
    %3181 = vdwg.mxu0
    %3182 = vmatprep.subr.bf16.mxu0 0
    %3183 = vmatpush1.bf16.msra.mxu0 0
    %3184 = vmatprep.subr.bf16.mxu0 0
    %3185 = vmatpush1.bf16.msra.mxu0 0
    %3186 = vmatprep.subr.bf16.mxu0 0
    %3187 = vmatpush1.bf16.msra.mxu0 0
    %3188 = vmatprep.subr.bf16.mxu0 0
    %3189 = vmatpush1.bf16.msra.mxu0 0
    %3190 = vmatprep.subr.bf16.mxu0 %v2879
    %3191 = vmatpush1.bf16.msra.mxu0 %v2876
    %3192 = vmatprep.subr.bf16.mxu0 %v2763
    %3193 = vmatpush1.bf16.msra.mxu0 %v2762
    %3194 = vmatprep.subr.bf16.mxu0 %v2747
    %3195 = vmatpush1.bf16.msra.mxu0 %v2746
    %3196 = vmatprep.subr.bf16.mxu0 %v2731
    %3197 = vmatpush1.bf16.msra.mxu0 %v2730
    %3198 = vmatprep.subr.bf16.mxu0 0
    %3199 = vmatpush2.bf16.msra.mxu0 0
    %3200 = vmatprep.subr.bf16.mxu0 0
    %3201 = vmatpush2.bf16.msra.mxu0 0
    %3202 = vmatprep.subr.bf16.mxu0 0
    %3203 = vmatpush2.bf16.msra.mxu0 0
    %3204 = vmatprep.subr.bf16.mxu0 0
    %3205 = vmatpush2.bf16.msra.mxu0 0
    %3206 = vmatprep.subr.bf16.mxu0 0
    %3207 = vmatpush2.bf16.msra.mxu0 0
    %3208 = vmatprep.subr.bf16.mxu0 0
    %3209 = vmatpush2.bf16.msra.mxu0 0
    %3210 = vmatprep.subr.bf16.mxu0 0
    %3211 = vmatpush2.bf16.msra.mxu0 0
    %3212 = vmatprep.subr.bf16.mxu0 0
    %3213 = vmatpush2.bf16.msra.mxu0 0
    %3214 = vmatprep.mubr.bf16.mxu0 0
    %3215 = vmatmul.mubr.bf16.gmra.mxu0 %v2830
    %v3216 = vpop.f32.mrf.mxu0
    %v3217 = vadd.f32 0.0, %v3216
    %v3218 = vpop.f32.mrf.mxu0
    %v3219 = vadd.f32 0.0, %v3218
    %v3220 = vpop.f32.mrf.mxu0
    %v3221 = vadd.f32 0.0, %v3220
    %v3222 = vpop.f32.mrf.mxu0
    %v3223 = vadd.f32 0.0, %v3222
    %3224 = vdwg.mxu0
    %s3225 = smul.u32 %s2448, 32
    %s3226 = smul.addr %s3225, 8
    %s3227 = scalar_lea.vmem %s4, %s3226
    %3228 = vst [vmem:[%s3227] sm:$0xff] %v2916
    %3229 = vst [vmem:[%s3227 + $0x8] sm:$0xff] %v2918
    %3230 = vst [vmem:[%s3227 + $0x10] sm:$0xff] %v2959
    %3231 = vst [vmem:[%s3227 + $0x18] sm:$0xff] %v2961
    %3232 = vst [vmem:[%s3227 + $0x20] sm:$0xff] %v3002
    %3233 = vst [vmem:[%s3227 + $0x28] sm:$0xff] %v3004
    %3234 = vst [vmem:[%s3227 + $0x30] sm:$0xff] %v3045
    %3235 = vst [vmem:[%s3227 + $0x38] sm:$0xff] %v3047
    %3236 = vst [vmem:[%s3227 + $0x40] sm:$0xff] %v3088
    %3237 = vst [vmem:[%s3227 + $0x48] sm:$0xff] %v3090
    %3238 = vst [vmem:[%s3227 + $0x50] sm:$0xff] %v3131
    %3239 = vst [vmem:[%s3227 + $0x58] sm:$0xff] %v3133
    %3240 = vst [vmem:[%s3227 + $0x60] sm:$0xff] %v3174
    %3241 = vst [vmem:[%s3227 + $0x68] sm:$0xff] %v3176
    %3242 = vst [vmem:[%s3227 + $0x70] sm:$0xff] %v3217
    %3243 = vst [vmem:[%s3227 + $0x78] sm:$0xff] %v3219
    %3244 = vst [vmem:[%s3227 + $0x80] sm:$0xff] %v2920
    %3245 = vst [vmem:[%s3227 + $0x88] sm:$0xff] %v2922
    %3246 = vst [vmem:[%s3227 + $0x90] sm:$0xff] %v2963
    %3247 = vst [vmem:[%s3227 + $0x98] sm:$0xff] %v2965
    %3248 = vst [vmem:[%s3227 + $0xa0] sm:$0xff] %v3006
    %3249 = vst [vmem:[%s3227 + $0xa8] sm:$0xff] %v3008
    %3250 = vst [vmem:[%s3227 + $0xb0] sm:$0xff] %v3049
    %3251 = vst [vmem:[%s3227 + $0xb8] sm:$0xff] %v3051
    %3252 = vst [vmem:[%s3227 + $0xc0] sm:$0xff] %v3092
    %3253 = vst [vmem:[%s3227 + $0xc8] sm:$0xff] %v3094
    %3254 = vst [vmem:[%s3227 + $0xd0] sm:$0xff] %v3135
    %3255 = vst [vmem:[%s3227 + $0xd8] sm:$0xff] %v3137
    %3256 = vst [vmem:[%s3227 + $0xe0] sm:$0xff] %v3178
    %3257 = vst [vmem:[%s3227 + $0xe8] sm:$0xff] %v3180
    %3258 = vst [vmem:[%s3227 + $0xf0] sm:$0xff] %v3221
    %3259 = vst [vmem:[%s3227 + $0xf8] sm:$0xff] %v3223
  $region18: #{sam_forward.1} parent=0 // loop_footer
    %s2452 = sadd.s32 1, %s2448
  $region19: #{sam_forward.1} parent=0 // loop_footer_branch
    %2447 = sbr.rel target = $region15
  $region20: #{sam_forward.1} parent=0 // loop_exit
    _
  // Predicated region
  $region21: #{sam_forward.1} parent=0 // pred_check
    _
  $region22: #{sam_forward.1} parent=0 // pred_check_branch
    %3261 = sbr.rel (0) target = $region24
  $region23: #{sam_forward.1} parent=0 // pred_region
    _
  $region24: #{sam_forward.1} parent=0 // pred_fallthru
    _
  // Predicated region
  $region25: #{sam_forward.1} parent=0 // pred_check
    _
  $region26: #{sam_forward.1} parent=0 // pred_check_branch
    %3263 = sbr.rel (0) target = $region28
  $region27: #{sam_forward.1} parent=0 // pred_region
    _
  $region28: #{sam_forward.1} parent=0 // pred_fallthru
    _
  // Predicated region
  $region29: #{sam_forward.1} parent=0 // pred_check
    _
  $region30: #{sam_forward.1} parent=0 // pred_check_branch
    %3265 = sbr.rel (0) target = $region32
  $region31: #{sam_forward.1} parent=0 // pred_region
    _
  $region32: #{sam_forward.1} parent=0 // pred_fallthru
    _
  // Predicated region
  $region33: #{sam_forward.1} parent=0 // pred_check
    _
  $region34: #{sam_forward.1} parent=0 // pred_check_branch
    %3267 = sbr.rel (0) target = $region36
  $region35: #{sam_forward.1} parent=0 // pred_region
    _
  $region36: #{sam_forward.1} parent=0 // pred_fallthru
    _

</llo_original>
